<compile_context>
chip_gen: v5e
topology: v5e:2x2
jax: 0.10.0
libtpu: 0.0.40
codegen_flags: <defaults>
</compile_context>

<pallas_src>
import functools

import jax
import jax.numpy as jnp
from jax.experimental import pallas as pl
from jax.experimental.pallas import tpu as pltpu

BN_EPS = 1e-5


def _round_up(x, m):
    return (x + m - 1) // m * m


def _tpu_mem_params():
    """Generation-aware per-step streaming target + VMEM budgets."""
    vmem_cap = 128 * 1024 * 1024
    try:
        vmem_cap = int(pltpu.get_tpu_info().vmem_capacity_bytes)
    except Exception:  # interpret mode / older jax -> conservative default
        pass
    if vmem_cap <= 96 * 1024 * 1024:
        # v7x-class: 64 MiB VMEM per TC but ~3.2 TB/s HBM -> need more bytes
        # per grid step to amortize the ~0.35us fixed cost, but a tighter
        # double-buffered footprint.
        return dict(target_stream=8 * 1024 * 1024,
                    footprint=30 * 1024 * 1024,
                    vmem_limit=44 * 1024 * 1024)
    # v5e / v6e: 128 MiB physical VMEM, ~0.8-1.4 TB/s HBM.
    return dict(target_stream=4 * 1024 * 1024,
                footprint=44 * 1024 * 1024,
                vmem_limit=64 * 1024 * 1024)


def _choose_tile_cols(S, stream_bpc, resident_bpc, target_stream, footprint):
    """Balanced multiple-of-128 column tile, sized by BYTES (no column cap).

    stream_bpc   : HBM bytes moved per column per grid step (amortization).
    resident_bpc : VMEM bytes resident per column (double-buffered tiles).
    """
    ts_vmem = max(footprint // max(resident_bpc, 1), 128)
    ts_want = pl.cdiv(target_stream, max(stream_bpc, 1))
    ts = min(ts_want, ts_vmem)
    ts = max(128, (ts // 128) * 128)
    ts = min(ts, _round_up(S, 128))
    T = pl.cdiv(S, ts)                      # grid steps at this tile size
    ts = _round_up(pl.cdiv(S, T), 128)      # re-balance across the T steps
    return int(ts)


# ---------------------------------------------------------------------------
# Pass 1: per-output-channel sum(y), sum(y^2) with y = W @ x (BN statistics
# without materializing y; no XLU transpose, tiny accumulators).
# ---------------------------------------------------------------------------
def _stats_kernel(x_ref, w_ref, sy_ref, sy2_ref, *, ts, t_per, n_cols):
    # x_ref: (1, K, ts) tile; w_ref: (N, K); sy/sy2: (1, 1, N, 1) f32 partials.
    t = pl.program_id(2)

    @pl.when(t == 0)
    def _init():
        sy_ref[...] = jnp.zeros_like(sy_ref)
        sy2_ref[...] = jnp.zeros_like(sy2_ref)

    # Column block this step logically owns (may be past the end for the
    # clamped duplicate blocks of an uneven split -> fully masked out).
    cb = pl.program_id(1) * t_per + t
    col0 = cb * ts
    lane = jax.lax.broadcasted_iota(jnp.int32, (1, ts), 1)
    valid = (col0 + lane) < n_cols                               # (1, ts)
    x = jnp.where(valid, x_ref[0], jnp.zeros_like(x_ref[0]))     # (K, ts)

    y = jnp.dot(w_ref[...], x, preferred_element_type=jnp.float32)   # (N, ts)
    sy_ref[0, 0] += jnp.sum(y, axis=1, keepdims=True)
    sy2_ref[0, 0] += jnp.sum(y * y, axis=1, keepdims=True)


def _stats_pallas(x_flat, w_cd, ts, nsplit, vmem_limit):
    B, K, S = x_flat.shape
    N = w_cd.shape[0]
    t_cols = pl.cdiv(S, ts)
    t_per = pl.cdiv(t_cols, nsplit)
    itemsize = jnp.dtype(x_flat.dtype).itemsize

    def x_map(b, s, t):
        cb = s * t_per + t
        return (b, 0, jnp.minimum(cb, t_cols - 1))   # clamp duplicate blocks

    kernel = functools.partial(_stats_kernel, ts=ts, t_per=t_per, n_cols=S)
    cost = pl.CostEstimate(
        flops=2 * B * S * K * N,
        transcendentals=0,
        bytes_accessed=B * K * S * itemsize + N * K * itemsize
        + 2 * B * nsplit * N * 4,
    )
    return pl.pallas_call(
        kernel,
        out_shape=(jax.ShapeDtypeStruct((B, nsplit, N, 1), jnp.float32),
                   jax.ShapeDtypeStruct((B, nsplit, N, 1), jnp.float32)),
        grid=(B, nsplit, t_per),
        in_specs=[pl.BlockSpec((1, K, ts), x_map),
                  pl.BlockSpec((N, K), lambda b, s, t: (0, 0))],
        out_specs=(pl.BlockSpec((1, 1, N, 1), lambda b, s, t: (b, s, 0, 0)),
                   pl.BlockSpec((1, 1, N, 1), lambda b, s, t: (b, s, 0, 0))),
        compiler_params=pltpu.CompilerParams(
            # (batch, split) own disjoint partial accumulators -> parallel
            # (v7x megacore can shard pass 1); column axis accumulates.
            dimension_semantics=("parallel", "parallel", "arbitrary"),
            vmem_limit_bytes=vmem_limit),
        cost_estimate=cost,
    )(x_flat, w_cd)


# ---------------------------------------------------------------------------
# Pass 2: fused 1x1x1 conv (BN scale folded into W) + shift + ReLU.
# ---------------------------------------------------------------------------
def _apply_kernel(x_ref, w_ref, shift_ref, o_ref):
    # x_ref: (1, K, ts); w_ref: (N, K) BN-scaled weight; shift_ref: (N, 1) f32;
    # o_ref: (1, N, ts) lane-dense (trailing partial block stores are masked).
    y = jnp.dot(w_ref[...], x_ref[0], preferred_element_type=jnp.float32)
    o_ref[0] = jnp.maximum(y + shift_ref[...], 0.0).astype(o_ref.dtype)


def _apply_pallas(x_flat, w_scaled, shift, ts, out_dtype, vmem_limit):
    B, K, S = x_flat.shape
    N = w_scaled.shape[0]
    T = pl.cdiv(S, ts)
    in_b = jnp.dtype(x_flat.dtype).itemsize
    out_b = jnp.dtype(out_dtype).itemsize
    cost = pl.CostEstimate(
        flops=2 * B * S * K * N,
        transcendentals=0,
        bytes_accessed=B * S * (K * in_b + N * out_b),
    )
    return pl.pallas_call(
        _apply_kernel,
        out_shape=jax.ShapeDtypeStruct((B, N, S), out_dtype),
        grid=(B, T),
        in_specs=[pl.BlockSpec((1, K, ts), lambda b, t: (b, 0, t)),
                  pl.BlockSpec((N, K), lambda b, t: (0, 0)),
                  pl.BlockSpec((N, 1), lambda b, t: (0, 0))],
        out_specs=pl.BlockSpec((1, N, ts), lambda b, t: (b, 0, t)),
        compiler_params=pltpu.CompilerParams(
            # Each tile owns its output block -> fully parallel grid.
            dimension_semantics=("parallel", "parallel"),
            vmem_limit_bytes=vmem_limit),
        cost_estimate=cost,
    )(x_flat, w_scaled, shift)


# ---------------------------------------------------------------------------
# Wrapper: rfftn -> Pallas stats -> fold BN -> Pallas conv+BN+ReLU -> irfftn
# ---------------------------------------------------------------------------
def fourier_unit_forward(x, conv_weight, bn_gamma, bn_beta, *,
                         compute_dtype=jnp.float32, out_dtype=None,
                         tile_cols=None):
    """FourierUnit.forward(x) with x in NCDHW = (B, C, D, H, W)."""
    B, C, D, H, W = x.shape
    K = 2 * C
    N = conv_weight.shape[0]                      # 2 * out_channels
    out_dtype = compute_dtype if out_dtype is None else out_dtype

    # TODO(synk): rfftn / irfftn have no Pallas primitive; they stay in jnp.fft.
    ff = jnp.fft.rfftn(x, s=(H, W), axes=(3, 4), norm="ortho")    # (B,C,D,H,Wf)
    Wf = ff.shape[-1]
    S = D * H * Wf

    # Cast fused into the concat, then a *free* reshape to (B, K, S).
    # No pad, no transpose, no extra HBM round trip.
    x_flat = jnp.concatenate([ff.real.astype(compute_dtype),
                              ff.imag.astype(compute_dtype)],
                             axis=1).reshape(B, K, S)

    itemsize = jnp.dtype(compute_dtype).itemsize
    out_itemsize = jnp.dtype(out_dtype).itemsize
    p = _tpu_mem_params()
    if tile_cols is not None:
        ts1 = ts2 = max(128, int(tile_cols) // 128 * 128)
    else:
        # Pass 1 streams only x and keeps tiny accumulators -> larger tile.
        ts1 = _choose_tile_cols(S, K * itemsize,
                                2 * K * itemsize + N * 4,
                                p["target_stream"], p["footprint"])
        # Pass 2 also double-buffers an (N, ts) output tile.
        ts2 = _choose_tile_cols(S, K * itemsize + N * out_itemsize,
                                2 * K * itemsize + 2 * N * out_itemsize + N * 4,
                                p["target_stream"], p["footprint"])

    w_cd = conv_weight.reshape(N, K).astype(compute_dtype)

    # ---- pass 1 (Pallas): per-output-channel sum(y), sum(y^2) ---------------
    t_cols = pl.cdiv(S, ts1)
    nsplit = 2 if (B == 1 and t_cols >= 2) else 1   # megacore split when B==1
    sy, sy2 = _stats_pallas(x_flat, w_cd, ts1, nsplit, p["vmem_limit"])

    # ---- tiny glue (f32): BN stats + fold the affine into the conv weight ---
    w_f32 = conv_weight.reshape(N, K).astype(jnp.float32)
    gamma = bn_gamma.reshape(N).astype(jnp.float32)
    beta = bn_beta.reshape(N).astype(jnp.float32)

    m_true = float(B * S)                         # BN counts true positions only
    sum_y = jnp.sum(sy, axis=(0, 1))[:, 0]                            # (N,)
    sum_y2 = jnp.sum(sy2, axis=(0, 1))[:, 0]                          # (N,)
    mean = sum_y / m_true
    # NOTE: E[y^2]-E[y]^2 in f32, clamped (single-pass statistic approximation).
    var = jnp.maximum(sum_y2 / m_true - mean * mean, 0.0)
    scale = gamma * jax.lax.rsqrt(var + BN_EPS)                       # (N,)
    shift = (beta - mean * scale)[:, None].astype(jnp.float32)        # (N, 1)
    w_scaled = (w_f32 * scale[:, None]).astype(compute_dtype)         # (N, K)

    # ---- pass 2 (Pallas): fused conv(+folded BN)+ReLU, direct (B,N,S) out ---
    y_flat = _apply_pallas(x_flat, w_scaled, shift, ts2, out_dtype,
                           p["vmem_limit"])                           # (B,N,S)
    y = y_flat.reshape(B, N, D, H, Wf)

    re, im = jnp.split(y, 2, axis=1)              # == torch.tensor_split(, 2, dim=1)
    z = jax.lax.complex(re.astype(jnp.float32), im.astype(jnp.float32))
    return jnp.fft.irfftn(z, s=(H, W), axes=(3, 4), norm="ortho")     # (B,Cout,D,H,W)


def fourier_unit_reference(x, conv_weight, bn_gamma, bn_beta):
    """Pure-JAX reference (mirrors the PyTorch forward in training mode)."""
    B, C, D, H, W = x.shape
    ff = jnp.fft.rfftn(x, s=(H, W), axes=(3, 4), norm="ortho")
    ff = jnp.concatenate([ff.real, ff.imag], axis=1)
    N = conv_weight.shape[0]
    w = conv_weight.reshape(N, 2 * C)
    y = jnp.einsum("oc,bcdhw->bodhw", w, ff, precision="highest")
    mean = jnp.mean(y, axis=(0, 2, 3, 4), keepdims=True)
    var = jnp.mean((y - mean) ** 2, axis=(0, 2, 3, 4), keepdims=True)
    y = (y - mean) / jnp.sqrt(var + BN_EPS)
    y = y * bn_gamma.reshape(1, N, 1, 1, 1) + bn_beta.reshape(1, N, 1, 1, 1)
    y = jnp.maximum(y, 0.0)
    re, im = jnp.split(y, 2, axis=1)
    z = jax.lax.complex(re, im)
    return jnp.fft.irfftn(z, s=(H, W), axes=(3, 4), norm="ortho")


if __name__ == "__main__":
    key = jax.random.PRNGKey(0)
    kx, kw = jax.random.split(key)

    # Small shapes consistent with the module (NCDHW input).
    B, C_in, C_out, D, H, W = 2, 4, 4, 4, 16, 16
    x = jax.random.normal(kx, (B, C_in, D, H, W), dtype=jnp.float32)

    # Conv3d(in=2*C_in, out=2*C_out, kernel_size=1, groups=1, bias=False)
    conv_weight = (
        jax.random.normal(kw, (2 * C_out, 2 * C_in, 1, 1, 1), dtype=jnp.float32)
        * (1.0 / jnp.sqrt(2.0 * C_in))
    )
    # BatchNorm3d(2*C_out) default affine init: gamma=1, beta=0.
    bn_gamma = jnp.ones((2 * C_out,), jnp.float32)
    bn_beta = jnp.zeros((2 * C_out,), jnp.float32)

    ref = fourier_unit_reference(x, conv_weight, bn_gamma, bn_beta)

    # 1) f32, auto byte-based tile sizing (one balanced tile per batch here).
    fwd_f32 = jax.jit(fourier_unit_forward)
    out = fwd_f32(x, conv_weight, bn_gamma, bn_beta)
    jax.block_until_ready(out)
    assert out.shape == (B, C_out, D, H, W), out.shape
    err = float(jnp.max(jnp.abs(out - ref)))
    assert jnp.allclose(out, ref, atol=2e-3, rtol=2e-3), err

    # 2) f32, forced small tile -> multi-tile grid, in-kernel trailing-lane
    #    masking in pass 1 and masked partial-block stores in pass 2.
    fwd_small = jax.jit(functools.partial(fourier_unit_forward, tile_cols=256))
    out_s = fwd_small(x, conv_weight, bn_gamma, bn_beta)
    jax.block_until_ready(out_s)
    err_s = float(jnp.max(jnp.abs(out_s - ref)))
    assert jnp.allclose(out_s, ref, atol=2e-3, rtol=2e-3), err_s

    # 3) B=1 with a small tile -> exercises the 2-way column split of pass 1
    #    (the v7x megacore sharding path) including the clamped duplicate block.
    x1 = x[:1]
    ref1 = fourier_unit_reference(x1, conv_weight, bn_gamma, bn_beta)
    fwd_b1 = jax.jit(functools.partial(fourier_unit_forward, tile_cols=128))
    out1 = fwd_b1(x1, conv_weight, bn_gamma, bn_beta)
    jax.block_until_ready(out1)
    err1 = float(jnp.max(jnp.abs(out1 - ref1)))
    assert jnp.allclose(out1, ref1, atol=2e-3, rtol=2e-3), err1

    # 4) bf16 streaming path (bandwidth mode on v6e/v7x): bf16 x, weights and
    #    pass-2 output; BN statistics stay f32-accumulated.
    fwd_bf16 = jax.jit(functools.partial(fourier_unit_forward,
                                         compute_dtype=jnp.bfloat16))
    out_bf16 = fwd_bf16(x, conv_weight, bn_gamma, bn_beta)
    jax.block_until_ready(out_bf16)
    err_bf16 = float(jnp.max(jnp.abs(out_bf16 - ref)))
    assert jnp.allclose(out_bf16, ref, atol=5e-2, rtol=5e-2), err_bf16

    print("KERNEL_OK")
</pallas_src>

<mosaic_0001>
module attributes {stable_mosaic.version = 11 : i64} {
  func.func @_stats_kernel(%arg0: i32, %arg1: i32, %arg2: i32, %arg3: memref<1x8x640xf32, #tpu.memory_space<vmem>>, %arg4: memref<8x8xf32, #tpu.memory_space<vmem>>, %arg5: memref<1x1x8x1xf32, #tpu.memory_space<vmem>>, %arg6: memref<1x1x8x1xf32, #tpu.memory_space<vmem>>) attributes {dimension_semantics = [#tpu.dimension_semantics<parallel>, #tpu.dimension_semantics<parallel>, #tpu.dimension_semantics<arbitrary>], iteration_bounds = array<i64: 2, 1, 1>, scalar_prefetch = 0 : i64, scratch_operands = 0 : i64, tpu.core_type = #tpu.core_type<tc>, window_params = [{transform_indices = @transform_0, window_bounds = array<i64: 1, 8, 640>}, {pipeline_mode = #tpu.pipeline_mode<synchronous>, transform_indices = @transform_1, window_bounds = array<i64: 8, 8>}, {transform_indices = @transform_2, window_bounds = array<i64: 1, 1, 8, 1>}, {transform_indices = @transform_3, window_bounds = array<i64: 1, 1, 8, 1>}]} {
    %c0_i32 = arith.constant 0 : i32
    %0 = arith.cmpi eq, %arg2, %c0_i32 : i32
    %1 = arith.extui %0 : i1 to i32
    %c0_i32_0 = arith.constant 0 : i32
    %2 = arith.cmpi ne, %1, %c0_i32_0 : i32
    scf.if %2 {
      %cst_24 = arith.constant 0.000000e+00 : f32
      %36 = vector.broadcast %cst_24 : f32 to vector<1x1x8x1xf32>
      %c0_25 = arith.constant 0 : index
      %c0_26 = arith.constant 0 : index
      %c0_27 = arith.constant 0 : index
      %c0_28 = arith.constant 0 : index
      %37 = vector.load %arg5[%c0_25, %c0_26, %c0_27, %c0_28] : memref<1x1x8x1xf32, #tpu.memory_space<vmem>>, vector<1x1x8x1xf32>
      tpu.vector_store %arg5[%c0_25, %c0_26, %c0_27, %c0_28], %36 {strides = array<i32>} : memref<1x1x8x1xf32, #tpu.memory_space<vmem>>, vector<1x1x8x1xf32>,
      %cst_29 = arith.constant 0.000000e+00 : f32
      %38 = vector.broadcast %cst_29 : f32 to vector<1x1x8x1xf32>
      %c0_30 = arith.constant 0 : index
      %c0_31 = arith.constant 0 : index
      %c0_32 = arith.constant 0 : index
      %c0_33 = arith.constant 0 : index
      %39 = vector.load %arg6[%c0_30, %c0_31, %c0_32, %c0_33] : memref<1x1x8x1xf32, #tpu.memory_space<vmem>>, vector<1x1x8x1xf32>
      tpu.vector_store %arg6[%c0_30, %c0_31, %c0_32, %c0_33], %38 {strides = array<i32>} : memref<1x1x8x1xf32, #tpu.memory_space<vmem>>, vector<1x1x8x1xf32>,
    } else {
    }
    %c1_i32 = arith.constant 1 : i32
    %3 = arith.muli %arg1, %c1_i32 : i32
    %4 = arith.addi %3, %arg2 : i32
    %c640_i32 = arith.constant 640 : i32
    %5 = arith.muli %4, %c640_i32 : i32
    %6 = tpu.iota {dimensions = array<i32: 1>} : vector<1x640xi32>
    %7 = vector.broadcast %5 : i32 to vector<1x640xi32>
    %8 = arith.addi %7, %6 : vector<1x640xi32>
    %c576_i32 = arith.constant 576 : i32
    %9 = vector.broadcast %c576_i32 : i32 to vector<1x640xi32>
    %10 = arith.cmpi slt, %8, %9 : vector<1x640xi32>
    %c0 = arith.constant 0 : index
    %c0_1 = arith.constant 0 : index
    %c0_2 = arith.constant 0 : index
    %11 = vector.load %arg3[%c0, %c0_1, %c0_2] : memref<1x8x640xf32, #tpu.memory_space<vmem>>, vector<1x8x640xf32>
    %12 = vector.shape_cast %11 : vector<1x8x640xf32> to vector<8x640xf32>
    %cst = arith.constant 0.000000e+00 : f32
    %13 = vector.broadcast %cst : f32 to vector<8x640xf32>
    %14 = vector.shape_cast %10 : vector<1x640xi1> to vector<1x640xi1>
    %15 = vector.broadcast %14 : vector<1x640xi1> to vector<8x640xi1>
    %16 = arith.select %15, %12, %13 : vector<8x640xi1>, vector<8x640xf32>
    %c0_3 = arith.constant 0 : index
    %c0_4 = arith.constant 0 : index
    %17 = vector.load %arg4[%c0_3, %c0_4] : memref<8x8xf32, #tpu.memory_space<vmem>>, vector<8x8xf32>
    %cst_5 = arith.constant dense<0.000000e+00> : vector<8x640xf32>
    %18 = tpu.matmul %17, %16, %cst_5 {dimension_numbers = #tpu.dot_dimension_numbers<[1], [0], [0], [1], [0, 0, 1, 1], [], []>} : vector<8x8xf32>, vector<8x640xf32>, vector<8x640xf32> -> vector<8x640xf32>
    %c0_6 = arith.constant 0 : index
    %c0_7 = arith.constant 0 : index
    %c0_8 = arith.constant 0 : index
    %c0_9 = arith.constant 0 : index
    %19 = vector.load %arg5[%c0_6, %c0_7, %c0_8, %c0_9] : memref<1x1x8x1xf32, #tpu.memory_space<vmem>>, vector<1x1x8x1xf32>
    %20 = vector.shape_cast %19 : vector<1x1x8x1xf32> to vector<8x1xf32>
    %cst_10 = arith.constant dense<0.000000e+00> : vector<8xf32>
    %21 = vector.multi_reduction <add>, %18, %cst_10 [1] : vector<8x640xf32> to vector<8xf32>
    %22 = vector.shape_cast %21 : vector<8xf32> to vector<8x1xf32>
    %23 = arith.addf %20, %22 : vector<8x1xf32>
    %c0_11 = arith.constant 0 : index
    %c0_12 = arith.constant 0 : index
    %c0_13 = arith.constant 0 : index
    %c0_14 = arith.constant 0 : index
    %24 = vector.load %arg5[%c0_11, %c0_12, %c0_13, %c0_14] : memref<1x1x8x1xf32, #tpu.memory_space<vmem>>, vector<1x1x8x1xf32>
    %25 = vector.shape_cast %24 : vector<1x1x8x1xf32> to vector<8x1xf32>
    %26 = vector.shape_cast %23 : vector<8x1xf32> to vector<1x1x8x1xf32>
    tpu.vector_store %arg5[%c0_11, %c0_12, %c0_13, %c0_14], %26 {strides = array<i32>} : memref<1x1x8x1xf32, #tpu.memory_space<vmem>>, vector<1x1x8x1xf32>,
    %c0_15 = arith.constant 0 : index
    %c0_16 = arith.constant 0 : index
    %c0_17 = arith.constant 0 : index
    %c0_18 = arith.constant 0 : index
    %27 = vector.load %arg6[%c0_15, %c0_16, %c0_17, %c0_18] : memref<1x1x8x1xf32, #tpu.memory_space<vmem>>, vector<1x1x8x1xf32>
    %28 = vector.shape_cast %27 : vector<1x1x8x1xf32> to vector<8x1xf32>
    %29 = arith.mulf %18, %18 : vector<8x640xf32>
    %cst_19 = arith.constant dense<0.000000e+00> : vector<8xf32>
    %30 = vector.multi_reduction <add>, %29, %cst_19 [1] : vector<8x640xf32> to vector<8xf32>
    %31 = vector.shape_cast %30 : vector<8xf32> to vector<8x1xf32>
    %32 = arith.addf %28, %31 : vector<8x1xf32>
    %c0_20 = arith.constant 0 : index
    %c0_21 = arith.constant 0 : index
    %c0_22 = arith.constant 0 : index
    %c0_23 = arith.constant 0 : index
    %33 = vector.load %arg6[%c0_20, %c0_21, %c0_22, %c0_23] : memref<1x1x8x1xf32, #tpu.memory_space<vmem>>, vector<1x1x8x1xf32>
    %34 = vector.shape_cast %33 : vector<1x1x8x1xf32> to vector<8x1xf32>
    %35 = vector.shape_cast %32 : vector<8x1xf32> to vector<1x1x8x1xf32>
    tpu.vector_store %arg6[%c0_20, %c0_21, %c0_22, %c0_23], %35 {strides = array<i32>} : memref<1x1x8x1xf32, #tpu.memory_space<vmem>>, vector<1x1x8x1xf32>,
    return
  }
  func.func @transform_0(%arg0: i32, %arg1: i32, %arg2: i32) -> (i32, i32, i32) {
    %c1_i32 = arith.constant 1 : i32
    %0 = arith.muli %arg1, %c1_i32 : i32
    %1 = arith.addi %0, %arg2 : i32
    %c0_i32 = arith.constant 0 : i32
    %2 = arith.minsi %1, %c0_i32 : i32
    %c0_i32_0 = arith.constant 0 : i32
    %c0_i32_1 = arith.constant 0 : i32
    return %arg0, %c0_i32_0, %2 : i32, i32, i32
  }
  func.func @transform_1(%arg0: i32, %arg1: i32, %arg2: i32) -> (i32, i32) {
    %c0_i32 = arith.constant 0 : i32
    %c0_i32_0 = arith.constant 0 : i32
    %c0_i32_1 = arith.constant 0 : i32
    return %c0_i32, %c0_i32_0 : i32, i32
  }
  func.func @transform_2(%arg0: i32, %arg1: i32, %arg2: i32) -> (i32, i32, i32, i32) {
    %c0_i32 = arith.constant 0 : i32
    %c0_i32_0 = arith.constant 0 : i32
    %c0_i32_1 = arith.constant 0 : i32
    return %arg0, %arg1, %c0_i32, %c0_i32_0 : i32, i32, i32, i32
  }
  func.func @transform_3(%arg0: i32, %arg1: i32, %arg2: i32) -> (i32, i32, i32, i32) {
    %c0_i32 = arith.constant 0 : i32
    %c0_i32_0 = arith.constant 0 : i32
    %c0_i32_1 = arith.constant 0 : i32
    return %arg0, %arg1, %c0_i32, %c0_i32_0 : i32, i32, i32, i32
  }
}

module attributes {stable_mosaic.version = 11 : i64} {
  func.func @_apply_kernel(%arg0: i32, %arg1: i32, %arg2: memref<1x8x640xf32, #tpu.memory_space<vmem>>, %arg3: memref<8x8xf32, #tpu.memory_space<vmem>>, %arg4: memref<8x1xf32, #tpu.memory_space<vmem>>, %arg5: memref<1x8x640xf32, #tpu.memory_space<vmem>>) attributes {dimension_semantics = [#tpu.dimension_semantics<parallel>, #tpu.dimension_semantics<parallel>], iteration_bounds = array<i64: 2, 1>, scalar_prefetch = 0 : i64, scratch_operands = 0 : i64, tpu.core_type = #tpu.core_type<tc>, window_params = [{transform_indices = @transform_0, window_bounds = array<i64: 1, 8, 640>}, {pipeline_mode = #tpu.pipeline_mode<synchronous>, transform_indices = @transform_1, window_bounds = array<i64: 8, 8>}, {pipeline_mode = #tpu.pipeline_mode<synchronous>, transform_indices = @transform_2, window_bounds = array<i64: 8, 1>}, {transform_indices = @transform_3, window_bounds = array<i64: 1, 8, 640>}]} {
    %c0 = arith.constant 0 : index
    %c0_0 = arith.constant 0 : index
    %0 = vector.load %arg3[%c0, %c0_0] : memref<8x8xf32, #tpu.memory_space<vmem>>, vector<8x8xf32>
    %c0_1 = arith.constant 0 : index
    %c0_2 = arith.constant 0 : index
    %c0_3 = arith.constant 0 : index
    %1 = vector.load %arg2[%c0_1, %c0_2, %c0_3] : memref<1x8x640xf32, #tpu.memory_space<vmem>>, vector<1x8x640xf32>
    %2 = vector.shape_cast %1 : vector<1x8x640xf32> to vector<8x640xf32>
    %cst = arith.constant dense<0.000000e+00> : vector<8x640xf32>
    %3 = tpu.matmul %0, %2, %cst {dimension_numbers = #tpu.dot_dimension_numbers<[1], [0], [0], [1], [0, 0, 1, 1], [], []>} : vector<8x8xf32>, vector<8x640xf32>, vector<8x640xf32> -> vector<8x640xf32>
    %c0_4 = arith.constant 0 : index
    %c0_5 = arith.constant 0 : index
    %4 = vector.load %arg4[%c0_4, %c0_5] : memref<8x1xf32, #tpu.memory_space<vmem>>, vector<8x1xf32>
    %5 = vector.broadcast %4 : vector<8x1xf32> to vector<8x640xf32>
    %6 = arith.addf %3, %5 : vector<8x640xf32>
    %cst_6 = arith.constant 0.000000e+00 : f32
    %7 = vector.broadcast %cst_6 : f32 to vector<8x640xf32>
    %8 = arith.maximumf %6, %7 : vector<8x640xf32>
    %c0_7 = arith.constant 0 : index
    %c0_8 = arith.constant 0 : index
    %c0_9 = arith.constant 0 : index
    %9 = vector.load %arg5[%c0_7, %c0_8, %c0_9] : memref<1x8x640xf32, #tpu.memory_space<vmem>>, vector<1x8x640xf32>
    %10 = vector.shape_cast %9 : vector<1x8x640xf32> to vector<8x640xf32>
    %11 = vector.shape_cast %8 : vector<8x640xf32> to vector<1x8x640xf32>
    tpu.vector_store %arg5[%c0_7, %c0_8, %c0_9], %11 {strides = array<i32>} : memref<1x8x640xf32, #tpu.memory_space<vmem>>, vector<1x8x640xf32>,
    return
  }
  func.func @transform_0(%arg0: i32, %arg1: i32) -> (i32, i32, i32) {
    %c0_i32 = arith.constant 0 : i32
    %c0_i32_0 = arith.constant 0 : i32
    return %arg0, %c0_i32, %arg1 : i32, i32, i32
  }
  func.func @transform_1(%arg0: i32, %arg1: i32) -> (i32, i32) {
    %c0_i32 = arith.constant 0 : i32
    %c0_i32_0 = arith.constant 0 : i32
    %c0_i32_1 = arith.constant 0 : i32
    return %c0_i32, %c0_i32_0 : i32, i32
  }
  func.func @transform_2(%arg0: i32, %arg1: i32) -> (i32, i32) {
    %c0_i32 = arith.constant 0 : i32
    %c0_i32_0 = arith.constant 0 : i32
    %c0_i32_1 = arith.constant 0 : i32
    return %c0_i32, %c0_i32_0 : i32, i32
  }
  func.func @transform_3(%arg0: i32, %arg1: i32) -> (i32, i32, i32) {
    %c0_i32 = arith.constant 0 : i32
    %c0_i32_0 = arith.constant 0 : i32
    return %arg0, %c0_i32, %arg1 : i32, i32, i32
  }
}

</mosaic_0001>

<llo_original>
// kernel: fourier_unit_forward.2
$region0: #{fourier_unit_forward.2}
  #allocation0 [shape = 'u32[]', space=smem, size = 0x4, offset = 0x4, fixed_abs, tag = 'smem constant byte address 0x4 - core index']
  #allocation1 [shape = 'u32[72,128]{1,0:T(1,128)}', space=vmem, size = 0x9000, scoped, tag = 'internal scratch']
  %s0 = inlined_call_operand.vmem [shape: f32[2,8,576], index: 0, kind: input, shape index: {}]
  %s1 = inlined_call_operand.vmem [shape: f32[8,8], index: 1, kind: input, shape index: {}]
  %s2 = inlined_call_operand.vmem [shape: f32[2,1,8,1], index: 2, kind: output, shape index: {0}]
  %s3 = inlined_call_operand.vmem [shape: f32[2,1,8,1], index: 3, kind: output, shape index: {1}]
  %4 = xla_tuple %s2, %s3
  %s5 = sld [smem:[#allocation0]]
  $region53: #{fourier_unit_forward.2} parent=0
    _
  %s7 = ssub.s32 1, %s5
  %s8 = scalar_select 0, %s7, %s5
  loop: start=0, step=1, limit=4
  $region2: #{fourier_unit_forward.2} parent=0 // loop_pre_header
    _
  $region3: #{fourier_unit_forward.2} parent=0 // loop_header
    %s10 = sphi 0, %s14
    %p11 = scmp.ge.s32.totalorder %s10, 4
    %s17 = sphi 0, %s36
    %s18 = sphi 0, %s32
    %s19 = sphi 0, %s28
    %s20 = sphi 0, %s17
    %s21 = sphi 0, %s18
    %s22 = sphi 0, %s19
    %s23 = sphi 0, %s20
    %s24 = sphi 0, %s21
    %s25 = sphi 0, %s22
    %s47 = sphi 0, %s49
    %s50 = sphi 0, %s47
    %s51 = sphi 0, %s50
    %s67 = sphi 0, %s51
    %s71 = sphi 0, %s71
    %s73 = sphi 0, %s71
    %s74 = sphi 0, %s73
    %s88 = sphi 0, %s74
    %s96 = sphi 0, %s98
    %s99 = sphi 0, %s96
    %s100 = sphi 0, %s99
    %s116 = sphi 0, %s100
    %s124 = sphi 0, %s126
    %s127 = sphi 0, %s124
    %s128 = sphi 0, %s127
    %s144 = sphi 0, %s128
  $region4: #{fourier_unit_forward.2} parent=0 // loop_header_branch
    %13 = sbr.rel (%p11) target = $region8
  $region5: #{fourier_unit_forward.2} parent=0 // loop_body
    %s15 = ssub.s32 %s10, 1
    %s16 = ssub.s32 %s10, 2
    %s26 = sadd.s32 1, %s19
    %p27 = scmp.ge.s32.totalorder %s26, 1
    %s28 = scalar_select %p27, 0, %s26
    %s29 = sadd.s32 1, %s18
    %s30 = scalar_select %p27, %s29, %s18
    %p31 = scmp.ge.s32.totalorder %s30, 1
    %s32 = scalar_select %p31, 0, %s30
    %s33 = sadd.s32 1, %s17
    %s34 = scalar_select %p31, %s33, %s17
    %p35 = scmp.ge.s32.totalorder %s34, 2
    %s36 = scalar_select %p35, 0, %s34
    %s37 = sadd.s32 %s18, %s19
    %p38 = scmp.lt.s32.totalorder %s37, 0
    %s39 = scalar_select %p38, %s37, 0
    %s40 = sadd.s32 %s32, %s28
    %p41 = scmp.lt.s32.totalorder %s40, 0
    %s42 = scalar_select %p41, %s40, 0
    %s43 = ssub.s32 %s17, %s36
    %s44 = ssub.s32 %s39, %s42
    %s45 = sor.u32 %s43, %s44
    %p46 = scmp.eq.s32.totalorder %s45, 0
    %s48 = sadd.s32 %s47, 1
    %s49 = scalar_select %p46, %s47, %s48
    %p52 = pneg %p46
    %p53 = scmp.eq.s32.totalorder %s10, 1
    %p54 = por %p52, %p53
    %p55 = scmp.ne.s32.totalorder %s47, %s50
    %p56 = scmp.eq.s32.totalorder %s10, 0
    %p57 = por %p55, %p56
    %p58 = scmp.ne.s32.totalorder %s47, %s50
    %p59 = scmp.eq.s32.totalorder %s15, 1
    %p60 = por %p58, %p59
    %p61 = scmp.ne.s32.totalorder %s50, %s51
    %p62 = scmp.eq.s32.totalorder %s15, 0
    %p63 = por %p61, %p62
    %p64 = scmp.ne.s32.totalorder %s50, %s51
    %p65 = scmp.eq.s32.totalorder %s16, 1
    %p66 = por %p64, %p65
    %p68 = scmp.ne.s32.totalorder %s51, %s67
    %p69 = scmp.eq.s32.totalorder %s16, 0
    %p70 = por %p68, %p69
    %s72 = sadd.s32 %s71, 1
    %p75 = scmp.eq.s32.totalorder %s10, 1
    %p76 = scmp.ne.s32.totalorder %s71, %s73
    %p77 = scmp.eq.s32.totalorder %s10, 0
    %p78 = por %p76, %p77
    %p79 = scmp.ne.s32.totalorder %s71, %s73
    %p80 = scmp.eq.s32.totalorder %s15, 1
    %p81 = por %p79, %p80
    %p82 = scmp.ne.s32.totalorder %s73, %s74
    %p83 = scmp.eq.s32.totalorder %s15, 0
    %p84 = por %p82, %p83
    %p85 = scmp.ne.s32.totalorder %s73, %s74
    %p86 = scmp.eq.s32.totalorder %s16, 1
    %p87 = por %p85, %p86
    %p89 = scmp.ne.s32.totalorder %s74, %s88
    %p90 = scmp.eq.s32.totalorder %s16, 0
    %p91 = por %p89, %p90
    %s92 = ssub.s32 %s17, %s36
    %s93 = ssub.s32 %s18, %s32
    %s94 = sor.u32 %s92, %s93
    %p95 = scmp.eq.s32.totalorder %s94, 0
    %s97 = sadd.s32 %s96, 1
    %s98 = scalar_select %p95, %s96, %s97
    %p101 = pneg %p95
    %p102 = scmp.eq.s32.totalorder %s10, 1
    %p103 = por %p101, %p102
    %p104 = scmp.ne.s32.totalorder %s96, %s99
    %p105 = scmp.eq.s32.totalorder %s10, 0
    %p106 = por %p104, %p105
    %p107 = scmp.ne.s32.totalorder %s96, %s99
    %p108 = scmp.eq.s32.totalorder %s15, 1
    %p109 = por %p107, %p108
    %p110 = scmp.ne.s32.totalorder %s99, %s100
    %p111 = scmp.eq.s32.totalorder %s15, 0
    %p112 = por %p110, %p111
    %p113 = scmp.ne.s32.totalorder %s99, %s100
    %p114 = scmp.eq.s32.totalorder %s16, 1
    %p115 = por %p113, %p114
    %p117 = scmp.ne.s32.totalorder %s100, %s116
    %p118 = scmp.eq.s32.totalorder %s16, 0
    %p119 = por %p117, %p118
    %s120 = ssub.s32 %s17, %s36
    %s121 = ssub.s32 %s18, %s32
    %s122 = sor.u32 %s120, %s121
    %p123 = scmp.eq.s32.totalorder %s122, 0
    %s125 = sadd.s32 %s124, 1
    %s126 = scalar_select %p123, %s124, %s125
    %p129 = pneg %p123
    %p130 = scmp.eq.s32.totalorder %s10, 1
    %p131 = por %p129, %p130
    %p132 = scmp.ne.s32.totalorder %s124, %s127
    %p133 = scmp.eq.s32.totalorder %s10, 0
    %p134 = por %p132, %p133
    %p135 = scmp.ne.s32.totalorder %s124, %s127
    %p136 = scmp.eq.s32.totalorder %s15, 1
    %p137 = por %p135, %p136
    %p138 = scmp.ne.s32.totalorder %s127, %s128
    %p139 = scmp.eq.s32.totalorder %s15, 0
    %p140 = por %p138, %p139
    %p141 = scmp.ne.s32.totalorder %s127, %s128
    %p142 = scmp.eq.s32.totalorder %s16, 1
    %p143 = por %p141, %p142
    %p145 = scmp.ne.s32.totalorder %s128, %s144
    %p146 = scmp.eq.s32.totalorder %s16, 0
    %p147 = por %p145, %p146
    %p148 = scmp.le.s32.totalorder 1, %s10
    %p149 = scmp.lt.s32.totalorder %s10, 3
    %p150 = pnand %p148, %p149
    %p151 = pneg %p150
    // Predicated region
    $region9: #{fourier_unit_forward.2} parent=5 // pred_check
      _
    $region10: #{fourier_unit_forward.2} parent=5 // pred_check_branch
      %153 = sbr.rel (%p150) target = $region12
    $region11: #{fourier_unit_forward.2} parent=5 // pred_region
      %s154 = ssub.s32 %s10, 1
      // Predicated region
      $region13: #{fourier_unit_forward.2} parent=11 // pred_check
        %p155 = pneg %p84
      $region14: #{fourier_unit_forward.2} parent=11 // pred_check_branch
        %157 = sbr.rel (%p155) target = $region16
      $region15: #{fourier_unit_forward.2} parent=11 // pred_region
        _
      $region16: #{fourier_unit_forward.2} parent=11 // pred_fallthru
        _
    $region12: #{fourier_unit_forward.2} parent=5 // pred_fallthru
      _
    %p158 = scmp.lt.s32.totalorder %s10, 2
    // Predicated region
    $region17: #{fourier_unit_forward.2} parent=5 // pred_check
      %p159 = pneg %p158
    $region18: #{fourier_unit_forward.2} parent=5 // pred_check_branch
      %161 = sbr.rel (%p159) target = $region20
    $region19: #{fourier_unit_forward.2} parent=5 // pred_region
      // Predicated region
      $region21: #{fourier_unit_forward.2} parent=19 // pred_check
        %p162 = pneg %p57
      $region22: #{fourier_unit_forward.2} parent=19 // pred_check_branch
        %164 = sbr.rel (%p162) target = $region24
      $region23: #{fourier_unit_forward.2} parent=19 // pred_region
        %s165 = sadd.s32 %s18, %s19
        %p166 = scmp.lt.s32.totalorder %s165, 0
        %s167 = scalar_select %p166, %s165, 0
        %s168 = smul.u32 5, %s167
        %p169 = scmp.lt.s32.totalorder %s17, 1
        %s170 = scalar_select %p169, %s17, 1
        %p171 = scmp.lt.s32.totalorder %s168, 4
        %s172 = scalar_select %p171, %s168, 4
        %s173 = smul.addr %s170, 5
        %s174 = sadd.s32 %s172, %s173
        %s175 = smul.addr %s174, 8
        %s176 = scalar_lea.vmem %s0, %s175
        %s177 = sadd.s32 %s18, %s19
        %p178 = scmp.lt.s32.totalorder %s177, 0
        %s179 = scalar_select %p178, %s177, 0
        %s180 = smul.u32 5, %s179
      $region24: #{fourier_unit_forward.2} parent=19 // pred_fallthru
        _
    $region20: #{fourier_unit_forward.2} parent=5 // pred_fallthru
      _
    %p181 = scmp.le.s32.totalorder 1, %s10
    %p182 = scmp.lt.s32.totalorder %s10, 3
    %p183 = pnand %p181, %p182
    %p184 = pneg %p183
    // Predicated region
    $region25: #{fourier_unit_forward.2} parent=5 // pred_check
      _
    $region26: #{fourier_unit_forward.2} parent=5 // pred_check_branch
      %186 = sbr.rel (%p183) target = $region28
    $region27: #{fourier_unit_forward.2} parent=5 // pred_region
      %s187 = ssub.s32 %s10, 1
      %s188 = sadd.s32 %s21, %s22
      %p189 = scmp.lt.s32.totalorder %s188, 0
      %s190 = scalar_select %p189, %s188, 0
      %s191 = smul.u32 5, %s190
      %p192 = scmp.lt.s32.totalorder %s20, 1
      %s193 = scalar_select %p192, %s20, 1
      %p194 = scmp.lt.s32.totalorder %s191, 4
      %s195 = scalar_select %p194, %s191, 4
      %s196 = smul.addr %s193, 5
      %s197 = sadd.s32 %s195, %s196
      %s198 = smul.addr %s197, 8
      %s199 = scalar_lea.vmem %s0, %s198
      %p200 = pneg %p63
      %p201 = pneg %p60
      %p202 = pneg %p84
      %p203 = pneg %p81
      %p204 = pneg %p112
      %p205 = pneg %p109
      %p206 = scmp.lt.s32.totalorder %s20, 1
      %s207 = scalar_select %p206, %s20, 1
      %p208 = scmp.lt.s32.totalorder %s21, 0
      %s209 = scalar_select %p208, %s21, 0
      %s210 = sadd.s32 %s209, %s207
      %s211 = smul.addr %s210, 8
      %s212 = scalar_lea.vmem %s2, %s211
      %p213 = pneg %p140
      %p214 = pneg %p137
      %p215 = scmp.lt.s32.totalorder %s20, 1
      %s216 = scalar_select %p215, %s20, 1
      %p217 = scmp.lt.s32.totalorder %s21, 0
      %s218 = scalar_select %p217, %s21, 0
      %s219 = sadd.s32 %s218, %s216
      %s220 = smul.addr %s219, 8
      %s221 = scalar_lea.vmem %s3, %s220
      %s222 = sadd.s32 %s21, %s22
      %p223 = scmp.lt.s32.totalorder %s222, 0
      %s224 = scalar_select %p223, %s222, 0
      %s225 = smul.u32 5, %s224
      %p226 = scmp.lt.s32.totalorder %s20, 1
      %s227 = scalar_select %p226, %s20, 1
      %p228 = scmp.lt.s32.totalorder %s225, 4
      %s229 = scalar_select %p228, %s225, 4
      %s230 = smul.addr %s227, 5
      %s231 = sadd.s32 %s229, %s230
      %s232 = smul.addr %s231, 8
      %s233 = scalar_lea.vmem %s0, %s232
      %s234 = sadd.s32 %s21, %s22
      %p235 = scmp.lt.s32.totalorder %s234, 0
      %s236 = scalar_select %p235, %s234, 0
      %s237 = smul.u32 5, %s236
      %p238 = scmp.lt.s32.totalorder %s20, 1
      %s239 = scalar_select %p238, %s20, 1
      %p240 = scmp.lt.s32.totalorder %s21, 0
      %s241 = scalar_select %p240, %s21, 0
      %s242 = sadd.s32 %s241, %s239
      %s243 = smul.addr %s242, 8
      %s244 = scalar_lea.vmem %s2, %s243
      %p245 = scmp.lt.s32.totalorder %s20, 1
      %s246 = scalar_select %p245, %s20, 1
      %p247 = scmp.lt.s32.totalorder %s21, 0
      %s248 = scalar_select %p247, %s21, 0
      %s249 = sadd.s32 %s248, %s246
      %s250 = smul.addr %s249, 8
      %s251 = scalar_lea.vmem %s3, %s250
      %p252 = scmp.eq.s32.totalorder %s22, 0
      // Predicated region
      $region29: #{fourier_unit_forward.2} parent=27 // pred_check
        %p253 = pneg %p252
      $region30: #{fourier_unit_forward.2} parent=27 // pred_check_branch
        %255 = sbr.rel (%p253) target = $region32
      $region31: #{fourier_unit_forward.2} parent=27 // pred_region
        %vm256 = vcmask 7168
        %257 = vst.msk [vmem:[%s244] sm:$0xff] %vm256, 0.0
        %258 = vst.msk [vmem:[%s251] sm:$0xff] %vm256, 0.0
      $region32: #{fourier_unit_forward.2} parent=27 // pred_fallthru
        _
      %s259 = sadd.s32 %s21, %s22
      %s260 = smul.u32 %s259, 640
      %v261 = vlaneseq
      %v262 = vand.u32 %v261, 127
      %v263 = vadd.s32 %v262, 128
      %v264 = vadd.s32 %v262, 256
      %v265 = vadd.s32 %v262, 384
      %v266 = vadd.s32 %v262, 512
      %v267 = vstv %s260
      %v268 = vadd.s32 %v267, %v262
      %v269 = vadd.s32 %v267, %v263
      %v270 = vadd.s32 %v267, %v264
      %v271 = vadd.s32 %v267, %v265
      %v272 = vadd.s32 %v267, %v266
      %vm273 = vcmp.lt.s32.totalorder %v268, 576
      %vm274 = vcmp.lt.s32.totalorder %v269, 576
      %vm275 = vcmp.lt.s32.totalorder %v270, 576
      %vm276 = vcmp.lt.s32.totalorder %v271, 576
      %vm277 = vcmp.lt.s32.totalorder %v272, 576
      %v278 = vld [vmem:[%s233] sm:$0xff]
      %v279 = vld [vmem:[%s233 + $0x8] sm:$0xff]
      %v280 = vld [vmem:[%s233 + $0x10] sm:$0xff]
      %v281 = vld [vmem:[%s233 + $0x18] sm:$0xff]
      %v282 = vld [vmem:[%s233 + $0x20] sm:$0xff]
      %v283 = vsel %vm273, 1, 0
      %v284 = vsel %vm274, 1, 0
      %v285 = vsel %vm275, 1, 0
      %v286 = vsel %vm276, 1, 0
      %v287 = vsel %vm277, 1, 0
      %vm288 = vcmp.eq.s32.totalorder %v283, 1
      %vm289 = vcmp.eq.s32.totalorder %v284, 1
      %vm290 = vcmp.eq.s32.totalorder %v285, 1
      %vm291 = vcmp.eq.s32.totalorder %v286, 1
      %vm292 = vcmp.eq.s32.totalorder %v287, 1
      %v293 = vsel %vm288, %v278, 0.0
      %v294 = vsel %vm289, %v279, 0.0
      %v295 = vsel %vm290, %v280, 0.0
      %v296 = vsel %vm291, %v281, 0.0
      %v297 = vsel %vm292, %v282, 0.0
      %v298 = vld [vmem:[%s1] sm:$0xff]
      %vm299 = vcmask 64512
      %v301 = vsel %vm299, %v298, 0
      %303 = vmatpush.msra.mxu0 0.0
      %304 = vmatpush.msra.mxu0 0.0
      %305 = vmatpush.msra.mxu0 0.0
      %306 = vmatpush.msra.mxu0 0.0
      %307 = vmatpush.msra.mxu0 0.0
      %308 = vmatpush.msra.mxu0 0.0
      %309 = vmatpush.msra.mxu0 0.0
      %310 = vmatpush.msra.mxu0 0.0
      %311 = vmatpush.msra.mxu0 0.0
      %312 = vmatpush.msra.mxu0 0.0
      %313 = vmatpush.msra.mxu0 0.0
      %314 = vmatpush.msra.mxu0 0.0
      %315 = vmatpush.msra.mxu0 0.0
      %316 = vmatpush.msra.mxu0 0.0
      %317 = vmatpush.msra.mxu0 0.0
      %318 = vmatpush.msra.mxu0 %v293
      %319 = vmatmul.f32.gmra.mxu0 %v301
      %v320 = vpop.f32.mrf.mxu0
      %v321 = vadd.f32 0.0, %v320
      %322 = vdwg.mxu0
      %323 = vmatpush.msra.mxu0 0.0
      %324 = vmatpush.msra.mxu0 0.0
      %325 = vmatpush.msra.mxu0 0.0
      %326 = vmatpush.msra.mxu0 0.0
      %327 = vmatpush.msra.mxu0 0.0
      %328 = vmatpush.msra.mxu0 0.0
      %329 = vmatpush.msra.mxu0 0.0
      %330 = vmatpush.msra.mxu0 0.0
      %331 = vmatpush.msra.mxu0 0.0
      %332 = vmatpush.msra.mxu0 0.0
      %333 = vmatpush.msra.mxu0 0.0
      %334 = vmatpush.msra.mxu0 0.0
      %335 = vmatpush.msra.mxu0 0.0
      %336 = vmatpush.msra.mxu0 0.0
      %337 = vmatpush.msra.mxu0 0.0
      %338 = vmatpush.msra.mxu0 %v294
      %339 = vmatmul.f32.gmra.mxu0 %v301
      %v340 = vpop.f32.mrf.mxu0
      %v341 = vadd.f32 0.0, %v340
      %342 = vdwg.mxu0
      %343 = vmatpush.msra.mxu0 0.0
      %344 = vmatpush.msra.mxu0 0.0
      %345 = vmatpush.msra.mxu0 0.0
      %346 = vmatpush.msra.mxu0 0.0
      %347 = vmatpush.msra.mxu0 0.0
      %348 = vmatpush.msra.mxu0 0.0
      %349 = vmatpush.msra.mxu0 0.0
      %350 = vmatpush.msra.mxu0 0.0
      %351 = vmatpush.msra.mxu0 0.0
      %352 = vmatpush.msra.mxu0 0.0
      %353 = vmatpush.msra.mxu0 0.0
      %354 = vmatpush.msra.mxu0 0.0
      %355 = vmatpush.msra.mxu0 0.0
      %356 = vmatpush.msra.mxu0 0.0
      %357 = vmatpush.msra.mxu0 0.0
      %358 = vmatpush.msra.mxu0 %v295
      %359 = vmatmul.f32.gmra.mxu0 %v301
      %v360 = vpop.f32.mrf.mxu0
      %v361 = vadd.f32 0.0, %v360
      %362 = vdwg.mxu0
      %363 = vmatpush.msra.mxu0 0.0
      %364 = vmatpush.msra.mxu0 0.0
      %365 = vmatpush.msra.mxu0 0.0
      %366 = vmatpush.msra.mxu0 0.0
      %367 = vmatpush.msra.mxu0 0.0
      %368 = vmatpush.msra.mxu0 0.0
      %369 = vmatpush.msra.mxu0 0.0
      %370 = vmatpush.msra.mxu0 0.0
      %371 = vmatpush.msra.mxu0 0.0
      %372 = vmatpush.msra.mxu0 0.0
      %373 = vmatpush.msra.mxu0 0.0
      %374 = vmatpush.msra.mxu0 0.0
      %375 = vmatpush.msra.mxu0 0.0
      %376 = vmatpush.msra.mxu0 0.0
      %377 = vmatpush.msra.mxu0 0.0
      %378 = vmatpush.msra.mxu0 %v296
      %379 = vmatmul.f32.gmra.mxu0 %v301
      %v380 = vpop.f32.mrf.mxu0
      %v381 = vadd.f32 0.0, %v380
      %382 = vdwg.mxu0
      %383 = vmatpush.msra.mxu0 0.0
      %384 = vmatpush.msra.mxu0 0.0
      %385 = vmatpush.msra.mxu0 0.0
      %386 = vmatpush.msra.mxu0 0.0
      %387 = vmatpush.msra.mxu0 0.0
      %388 = vmatpush.msra.mxu0 0.0
      %389 = vmatpush.msra.mxu0 0.0
      %390 = vmatpush.msra.mxu0 0.0
      %391 = vmatpush.msra.mxu0 0.0
      %392 = vmatpush.msra.mxu0 0.0
      %393 = vmatpush.msra.mxu0 0.0
      %394 = vmatpush.msra.mxu0 0.0
      %395 = vmatpush.msra.mxu0 0.0
      %396 = vmatpush.msra.mxu0 0.0
      %397 = vmatpush.msra.mxu0 0.0
      %398 = vmatpush.msra.mxu0 %v297
      %399 = vmatmul.f32.gmra.mxu0 %v301
      %v400 = vpop.f32.mrf.mxu0
      %v401 = vadd.f32 0.0, %v400
      %402 = vdwg.mxu0
      %v403 = vld [vmem:[%s244] sm:$0xff]
      %v404 = vadd.f32 %v321, %v341
      %v405 = vadd.f32 %v404, %v361
      %v406 = vadd.f32 %v405, %v381
      %v407 = vadd.f32 %v406, %v401
      %408 = vadd.xlane.f32.xlu0 %v407
      %v409 = vpop.xlane.xlu0 %408
      %v410 = vadd.f32 %v403, %v409
      %vm411 = vcmask 7168
      %412 = vst.msk [vmem:[%s244] sm:$0xff] %vm411, %v410
      %v413 = vld [vmem:[%s251] sm:$0xff]
      %v414 = vmul.f32 %v321, %v321
      %v415 = vmul.f32 %v341, %v341
      %v416 = vmul.f32 %v361, %v361
      %v417 = vmul.f32 %v381, %v381
      %v418 = vmul.f32 %v401, %v401
      %v419 = vadd.f32 %v414, %v415
      %v420 = vadd.f32 %v419, %v416
      %v421 = vadd.f32 %v420, %v417
      %v422 = vadd.f32 %v421, %v418
      %423 = vadd.xlane.f32.xlu0 %v422
      %v424 = vpop.xlane.xlu0 %423
      %v425 = vadd.f32 %v413, %v424
      %426 = vst.msk [vmem:[%s251] sm:$0xff] %vm411, %v425
      %p427 = scmp.lt.s32.totalorder %s20, 1
      %s428 = scalar_select %p427, %s20, 1
      %p429 = scmp.lt.s32.totalorder %s21, 0
      %s430 = scalar_select %p429, %s21, 0
      %s431 = sadd.s32 %s430, %s428
      %s432 = smul.addr %s431, 8
      %s433 = scalar_lea.vmem %s2, %s432
      %p434 = scmp.lt.s32.totalorder %s20, 1
      %s435 = scalar_select %p434, %s20, 1
      %p436 = scmp.lt.s32.totalorder %s21, 0
      %s437 = scalar_select %p436, %s21, 0
      %s438 = sadd.s32 %s437, %s435
      %s439 = smul.addr %s438, 8
      %s440 = scalar_lea.vmem %s3, %s439
      // Predicated region
      $region33: #{fourier_unit_forward.2} parent=27 // pred_check
        %p441 = pneg %p109
      $region34: #{fourier_unit_forward.2} parent=27 // pred_check_branch
        %443 = sbr.rel (%p441) target = $region36
      $region35: #{fourier_unit_forward.2} parent=27 // pred_region
        _
      $region36: #{fourier_unit_forward.2} parent=27 // pred_fallthru
        _
      // Predicated region
      $region37: #{fourier_unit_forward.2} parent=27 // pred_check
        %p444 = pneg %p137
      $region38: #{fourier_unit_forward.2} parent=27 // pred_check_branch
        %446 = sbr.rel (%p444) target = $region40
      $region39: #{fourier_unit_forward.2} parent=27 // pred_region
        _
      $region40: #{fourier_unit_forward.2} parent=27 // pred_fallthru
        _
    $region28: #{fourier_unit_forward.2} parent=5 // pred_fallthru
      _
    %p447 = scmp.le.s32.totalorder 2, %s10
    // Predicated region
    $region41: #{fourier_unit_forward.2} parent=5 // pred_check
      %p448 = pneg %p447
    $region42: #{fourier_unit_forward.2} parent=5 // pred_check_branch
      %450 = sbr.rel (%p448) target = $region44
    $region43: #{fourier_unit_forward.2} parent=5 // pred_region
      %s451 = ssub.s32 %s10, 2
      // Predicated region
      $region45: #{fourier_unit_forward.2} parent=43 // pred_check
        %p452 = pneg %p115
      $region46: #{fourier_unit_forward.2} parent=43 // pred_check_branch
        %454 = sbr.rel (%p452) target = $region48
      $region47: #{fourier_unit_forward.2} parent=43 // pred_region
        %p455 = scmp.lt.s32.totalorder %s23, 1
        %s456 = scalar_select %p455, %s23, 1
        %p457 = scmp.lt.s32.totalorder %s24, 0
        %s458 = scalar_select %p457, %s24, 0
        %s459 = sadd.s32 %s458, %s456
        %s460 = smul.addr %s459, 8
        %s461 = scalar_lea.vmem %s2, %s460
      $region48: #{fourier_unit_forward.2} parent=43 // pred_fallthru
        _
      // Predicated region
      $region49: #{fourier_unit_forward.2} parent=43 // pred_check
        %p462 = pneg %p143
      $region50: #{fourier_unit_forward.2} parent=43 // pred_check_branch
        %464 = sbr.rel (%p462) target = $region52
      $region51: #{fourier_unit_forward.2} parent=43 // pred_region
        %p465 = scmp.lt.s32.totalorder %s23, 1
        %s466 = scalar_select %p465, %s23, 1
        %p467 = scmp.lt.s32.totalorder %s24, 0
        %s468 = scalar_select %p467, %s24, 0
        %s469 = sadd.s32 %s468, %s466
        %s470 = smul.addr %s469, 8
        %s471 = scalar_lea.vmem %s3, %s470
      $region52: #{fourier_unit_forward.2} parent=43 // pred_fallthru
        _
    $region44: #{fourier_unit_forward.2} parent=5 // pred_fallthru
      _
  $region6: #{fourier_unit_forward.2} parent=0 // loop_footer
    %s14 = sadd.s32 1, %s10
  $region7: #{fourier_unit_forward.2} parent=0 // loop_footer_branch
    %9 = sbr.rel target = $region3
  $region8: #{fourier_unit_forward.2} parent=0 // loop_exit
    _

// kernel: fourier_unit_forward.3
$region0: #{fourier_unit_forward.3}
  #allocation0 [shape = 'u32[]', space=smem, size = 0x4, offset = 0x4, fixed_abs, tag = 'smem constant byte address 0x4 - core index']
  #allocation1 [shape = 'u32[72,128]{1,0:T(1,128)}', space=vmem, size = 0x9000, scoped, tag = 'internal scratch']
  %s0 = inlined_call_operand.vmem [shape: f32[2,8,576], index: 0, kind: input, shape index: {}]
  %s1 = inlined_call_operand.vmem [shape: f32[8,8], index: 1, kind: input, shape index: {}]
  %s2 = inlined_call_operand.vmem [shape: f32[8,1], index: 2, kind: input, shape index: {}]
  %s3 = inlined_call_operand.vmem [shape: f32[2,8,576], index: 3, kind: output, shape index: {}]
  %s4 = sld [smem:[#allocation0]]
  $region45: #{fourier_unit_forward.3} parent=0
    _
  %s6 = ssub.s32 1, %s4
  %s7 = scalar_select 0, %s6, %s4
  loop: start=0, step=1, limit=4
  $region2: #{fourier_unit_forward.3} parent=0 // loop_pre_header
    _
  $region3: #{fourier_unit_forward.3} parent=0 // loop_header
    %s9 = sphi 0, %s13
    %p10 = scmp.ge.s32.totalorder %s9, 4
    %s16 = sphi 0, %s28
    %s17 = sphi 0, %s24
    %s18 = sphi 0, %s16
    %s19 = sphi 0, %s17
    %s20 = sphi 0, %s18
    %s21 = sphi 0, %s19
    %s33 = sphi 0, %s35
    %s36 = sphi 0, %s33
    %s37 = sphi 0, %s36
    %s53 = sphi 0, %s37
    %s57 = sphi 0, %s57
    %s59 = sphi 0, %s57
    %s60 = sphi 0, %s59
    %s74 = sphi 0, %s60
    %s78 = sphi 0, %s78
    %s80 = sphi 0, %s78
    %s81 = sphi 0, %s80
    %s95 = sphi 0, %s81
    %s103 = sphi 0, %s105
    %s106 = sphi 0, %s103
    %s107 = sphi 0, %s106
    %s123 = sphi 0, %s107
  $region4: #{fourier_unit_forward.3} parent=0 // loop_header_branch
    %12 = sbr.rel (%p10) target = $region8
  $region5: #{fourier_unit_forward.3} parent=0 // loop_body
    %s14 = ssub.s32 %s9, 1
    %s15 = ssub.s32 %s9, 2
    %s22 = sadd.s32 1, %s17
    %p23 = scmp.ge.s32.totalorder %s22, 1
    %s24 = scalar_select %p23, 0, %s22
    %s25 = sadd.s32 1, %s16
    %s26 = scalar_select %p23, %s25, %s16
    %p27 = scmp.ge.s32.totalorder %s26, 2
    %s28 = scalar_select %p27, 0, %s26
    %s29 = ssub.s32 %s16, %s28
    %s30 = ssub.s32 %s17, %s24
    %s31 = sor.u32 %s29, %s30
    %p32 = scmp.eq.s32.totalorder %s31, 0
    %s34 = sadd.s32 %s33, 1
    %s35 = scalar_select %p32, %s33, %s34
    %p38 = pneg %p32
    %p39 = scmp.eq.s32.totalorder %s9, 1
    %p40 = por %p38, %p39
    %p41 = scmp.ne.s32.totalorder %s33, %s36
    %p42 = scmp.eq.s32.totalorder %s9, 0
    %p43 = por %p41, %p42
    %p44 = scmp.ne.s32.totalorder %s33, %s36
    %p45 = scmp.eq.s32.totalorder %s14, 1
    %p46 = por %p44, %p45
    %p47 = scmp.ne.s32.totalorder %s36, %s37
    %p48 = scmp.eq.s32.totalorder %s14, 0
    %p49 = por %p47, %p48
    %p50 = scmp.ne.s32.totalorder %s36, %s37
    %p51 = scmp.eq.s32.totalorder %s15, 1
    %p52 = por %p50, %p51
    %p54 = scmp.ne.s32.totalorder %s37, %s53
    %p55 = scmp.eq.s32.totalorder %s15, 0
    %p56 = por %p54, %p55
    %s58 = sadd.s32 %s57, 1
    %p61 = scmp.eq.s32.totalorder %s9, 1
    %p62 = scmp.ne.s32.totalorder %s57, %s59
    %p63 = scmp.eq.s32.totalorder %s9, 0
    %p64 = por %p62, %p63
    %p65 = scmp.ne.s32.totalorder %s57, %s59
    %p66 = scmp.eq.s32.totalorder %s14, 1
    %p67 = por %p65, %p66
    %p68 = scmp.ne.s32.totalorder %s59, %s60
    %p69 = scmp.eq.s32.totalorder %s14, 0
    %p70 = por %p68, %p69
    %p71 = scmp.ne.s32.totalorder %s59, %s60
    %p72 = scmp.eq.s32.totalorder %s15, 1
    %p73 = por %p71, %p72
    %p75 = scmp.ne.s32.totalorder %s60, %s74
    %p76 = scmp.eq.s32.totalorder %s15, 0
    %p77 = por %p75, %p76
    %s79 = sadd.s32 %s78, 1
    %p82 = scmp.eq.s32.totalorder %s9, 1
    %p83 = scmp.ne.s32.totalorder %s78, %s80
    %p84 = scmp.eq.s32.totalorder %s9, 0
    %p85 = por %p83, %p84
    %p86 = scmp.ne.s32.totalorder %s78, %s80
    %p87 = scmp.eq.s32.totalorder %s14, 1
    %p88 = por %p86, %p87
    %p89 = scmp.ne.s32.totalorder %s80, %s81
    %p90 = scmp.eq.s32.totalorder %s14, 0
    %p91 = por %p89, %p90
    %p92 = scmp.ne.s32.totalorder %s80, %s81
    %p93 = scmp.eq.s32.totalorder %s15, 1
    %p94 = por %p92, %p93
    %p96 = scmp.ne.s32.totalorder %s81, %s95
    %p97 = scmp.eq.s32.totalorder %s15, 0
    %p98 = por %p96, %p97
    %s99 = ssub.s32 %s16, %s28
    %s100 = ssub.s32 %s17, %s24
    %s101 = sor.u32 %s99, %s100
    %p102 = scmp.eq.s32.totalorder %s101, 0
    %s104 = sadd.s32 %s103, 1
    %s105 = scalar_select %p102, %s103, %s104
    %p108 = pneg %p102
    %p109 = scmp.eq.s32.totalorder %s9, 1
    %p110 = por %p108, %p109
    %p111 = scmp.ne.s32.totalorder %s103, %s106
    %p112 = scmp.eq.s32.totalorder %s9, 0
    %p113 = por %p111, %p112
    %p114 = scmp.ne.s32.totalorder %s103, %s106
    %p115 = scmp.eq.s32.totalorder %s14, 1
    %p116 = por %p114, %p115
    %p117 = scmp.ne.s32.totalorder %s106, %s107
    %p118 = scmp.eq.s32.totalorder %s14, 0
    %p119 = por %p117, %p118
    %p120 = scmp.ne.s32.totalorder %s106, %s107
    %p121 = scmp.eq.s32.totalorder %s15, 1
    %p122 = por %p120, %p121
    %p124 = scmp.ne.s32.totalorder %s107, %s123
    %p125 = scmp.eq.s32.totalorder %s15, 0
    %p126 = por %p124, %p125
    %p127 = scmp.le.s32.totalorder 1, %s9
    %p128 = scmp.lt.s32.totalorder %s9, 3
    %p129 = pnand %p127, %p128
    %p130 = pneg %p129
    // Predicated region
    $region9: #{fourier_unit_forward.3} parent=5 // pred_check
      _
    $region10: #{fourier_unit_forward.3} parent=5 // pred_check_branch
      %132 = sbr.rel (%p129) target = $region12
    $region11: #{fourier_unit_forward.3} parent=5 // pred_region
      %s133 = ssub.s32 %s9, 1
      // Predicated region
      $region13: #{fourier_unit_forward.3} parent=11 // pred_check
        %p134 = pneg %p70
      $region14: #{fourier_unit_forward.3} parent=11 // pred_check_branch
        %136 = sbr.rel (%p134) target = $region16
      $region15: #{fourier_unit_forward.3} parent=11 // pred_region
        _
      $region16: #{fourier_unit_forward.3} parent=11 // pred_fallthru
        _
      // Predicated region
      $region17: #{fourier_unit_forward.3} parent=11 // pred_check
        %p137 = pneg %p91
      $region18: #{fourier_unit_forward.3} parent=11 // pred_check_branch
        %139 = sbr.rel (%p137) target = $region20
      $region19: #{fourier_unit_forward.3} parent=11 // pred_region
        _
      $region20: #{fourier_unit_forward.3} parent=11 // pred_fallthru
        _
    $region12: #{fourier_unit_forward.3} parent=5 // pred_fallthru
      _
    %p140 = scmp.lt.s32.totalorder %s9, 2
    // Predicated region
    $region21: #{fourier_unit_forward.3} parent=5 // pred_check
      %p141 = pneg %p140
    $region22: #{fourier_unit_forward.3} parent=5 // pred_check_branch
      %143 = sbr.rel (%p141) target = $region24
    $region23: #{fourier_unit_forward.3} parent=5 // pred_region
      // Predicated region
      $region25: #{fourier_unit_forward.3} parent=23 // pred_check
        %p144 = pneg %p43
      $region26: #{fourier_unit_forward.3} parent=23 // pred_check_branch
        %146 = sbr.rel (%p144) target = $region28
      $region27: #{fourier_unit_forward.3} parent=23 // pred_region
        %s147 = smul.u32 5, %s17
        %p148 = scmp.lt.s32.totalorder %s16, 1
        %s149 = scalar_select %p148, %s16, 1
        %p150 = scmp.lt.s32.totalorder %s147, 4
        %s151 = scalar_select %p150, %s147, 4
        %s152 = smul.addr %s149, 5
        %s153 = sadd.s32 %s151, %s152
        %s154 = smul.addr %s153, 8
        %s155 = scalar_lea.vmem %s0, %s154
        %s156 = smul.u32 5, %s17
      $region28: #{fourier_unit_forward.3} parent=23 // pred_fallthru
        _
    $region24: #{fourier_unit_forward.3} parent=5 // pred_fallthru
      _
    %p157 = scmp.le.s32.totalorder 1, %s9
    %p158 = scmp.lt.s32.totalorder %s9, 3
    %p159 = pnand %p157, %p158
    %p160 = pneg %p159
    // Predicated region
    $region29: #{fourier_unit_forward.3} parent=5 // pred_check
      _
    $region30: #{fourier_unit_forward.3} parent=5 // pred_check_branch
      %162 = sbr.rel (%p159) target = $region32
    $region31: #{fourier_unit_forward.3} parent=5 // pred_region
      %s163 = ssub.s32 %s9, 1
      %s164 = smul.u32 5, %s19
      %p165 = scmp.lt.s32.totalorder %s18, 1
      %s166 = scalar_select %p165, %s18, 1
      %p167 = scmp.lt.s32.totalorder %s164, 4
      %s168 = scalar_select %p167, %s164, 4
      %s169 = smul.addr %s166, 5
      %s170 = sadd.s32 %s168, %s169
      %s171 = smul.addr %s170, 8
      %s172 = scalar_lea.vmem %s0, %s171
      %p173 = pneg %p49
      %p174 = pneg %p46
      %p175 = pneg %p70
      %p176 = pneg %p67
      %p177 = pneg %p91
      %p178 = pneg %p88
      %p179 = pneg %p119
      %p180 = pneg %p116
      %s181 = smul.u32 5, %s19
      %p182 = scmp.lt.s32.totalorder %s18, 1
      %s183 = scalar_select %p182, %s18, 1
      %p184 = scmp.lt.s32.totalorder %s181, 4
      %s185 = scalar_select %p184, %s181, 4
      %s186 = smul.addr %s183, 5
      %s187 = sadd.s32 %s185, %s186
      %s188 = smul.addr %s187, 8
      %s189 = scalar_lea.vmem %s3, %s188
      %s190 = smul.u32 5, %s19
      %p191 = scmp.lt.s32.totalorder %s18, 1
      %s192 = scalar_select %p191, %s18, 1
      %p193 = scmp.lt.s32.totalorder %s190, 4
      %s194 = scalar_select %p193, %s190, 4
      %s195 = smul.addr %s192, 5
      %s196 = sadd.s32 %s194, %s195
      %s197 = smul.addr %s196, 8
      %s198 = scalar_lea.vmem %s0, %s197
      %s199 = smul.u32 5, %s19
      %s200 = smul.u32 5, %s19
      %p201 = scmp.lt.s32.totalorder %s18, 1
      %s202 = scalar_select %p201, %s18, 1
      %p203 = scmp.lt.s32.totalorder %s200, 4
      %s204 = scalar_select %p203, %s200, 4
      %s205 = smul.addr %s202, 5
      %s206 = sadd.s32 %s204, %s205
      %s207 = smul.addr %s206, 8
      %s208 = scalar_lea.vmem %s3, %s207
      %s209 = smul.u32 5, %s19
      %v210 = vld [vmem:[%s1] sm:$0xff]
      %v211 = vld [vmem:[%s198] sm:$0xff]
      %v212 = vld [vmem:[%s198 + $0x8] sm:$0xff]
      %v213 = vld [vmem:[%s198 + $0x10] sm:$0xff]
      %v214 = vld [vmem:[%s198 + $0x18] sm:$0xff]
      %v215 = vld [vmem:[%s198 + $0x20] sm:$0xff]
      %v216 = vld [vmem:[%s2] sm:$0xff]
      %218 = vset.pattern.permute.xlu0 0
      %219 = vperm.xlu0 %218, %v216
      %v220 = vpop.permute.xlu0 %219
      %vm222 = vcmask 64512
      %v224 = vsel %vm222, %v210, 0
      %226 = vmatpush.msra.mxu0 0.0
      %227 = vmatpush.msra.mxu0 0.0
      %228 = vmatpush.msra.mxu0 0.0
      %229 = vmatpush.msra.mxu0 0.0
      %230 = vmatpush.msra.mxu0 0.0
      %231 = vmatpush.msra.mxu0 0.0
      %232 = vmatpush.msra.mxu0 0.0
      %233 = vmatpush.msra.mxu0 0.0
      %234 = vmatpush.msra.mxu0 0.0
      %235 = vmatpush.msra.mxu0 0.0
      %236 = vmatpush.msra.mxu0 0.0
      %237 = vmatpush.msra.mxu0 0.0
      %238 = vmatpush.msra.mxu0 0.0
      %239 = vmatpush.msra.mxu0 0.0
      %240 = vmatpush.msra.mxu0 0.0
      %241 = vmatpush.msra.mxu0 %v211
      %242 = vmatmul.f32.gmra.mxu0 %v224
      %v243 = vpop.f32.mrf.mxu0
      %v244 = vadd.f32 %v220, %v243
      %245 = vdwg.mxu0
      %246 = vmatpush.msra.mxu0 0.0
      %247 = vmatpush.msra.mxu0 0.0
      %248 = vmatpush.msra.mxu0 0.0
      %249 = vmatpush.msra.mxu0 0.0
      %250 = vmatpush.msra.mxu0 0.0
      %251 = vmatpush.msra.mxu0 0.0
      %252 = vmatpush.msra.mxu0 0.0
      %253 = vmatpush.msra.mxu0 0.0
      %254 = vmatpush.msra.mxu0 0.0
      %255 = vmatpush.msra.mxu0 0.0
      %256 = vmatpush.msra.mxu0 0.0
      %257 = vmatpush.msra.mxu0 0.0
      %258 = vmatpush.msra.mxu0 0.0
      %259 = vmatpush.msra.mxu0 0.0
      %260 = vmatpush.msra.mxu0 0.0
      %261 = vmatpush.msra.mxu0 %v212
      %262 = vmatmul.f32.gmra.mxu0 %v224
      %v263 = vpop.f32.mrf.mxu0
      %v264 = vadd.f32 %v220, %v263
      %265 = vdwg.mxu0
      %266 = vmatpush.msra.mxu0 0.0
      %267 = vmatpush.msra.mxu0 0.0
      %268 = vmatpush.msra.mxu0 0.0
      %269 = vmatpush.msra.mxu0 0.0
      %270 = vmatpush.msra.mxu0 0.0
      %271 = vmatpush.msra.mxu0 0.0
      %272 = vmatpush.msra.mxu0 0.0
      %273 = vmatpush.msra.mxu0 0.0
      %274 = vmatpush.msra.mxu0 0.0
      %275 = vmatpush.msra.mxu0 0.0
      %276 = vmatpush.msra.mxu0 0.0
      %277 = vmatpush.msra.mxu0 0.0
      %278 = vmatpush.msra.mxu0 0.0
      %279 = vmatpush.msra.mxu0 0.0
      %280 = vmatpush.msra.mxu0 0.0
      %281 = vmatpush.msra.mxu0 %v213
      %282 = vmatmul.f32.gmra.mxu0 %v224
      %v283 = vpop.f32.mrf.mxu0
      %v284 = vadd.f32 %v220, %v283
      %285 = vdwg.mxu0
      %286 = vmatpush.msra.mxu0 0.0
      %287 = vmatpush.msra.mxu0 0.0
      %288 = vmatpush.msra.mxu0 0.0
      %289 = vmatpush.msra.mxu0 0.0
      %290 = vmatpush.msra.mxu0 0.0
      %291 = vmatpush.msra.mxu0 0.0
      %292 = vmatpush.msra.mxu0 0.0
      %293 = vmatpush.msra.mxu0 0.0
      %294 = vmatpush.msra.mxu0 0.0
      %295 = vmatpush.msra.mxu0 0.0
      %296 = vmatpush.msra.mxu0 0.0
      %297 = vmatpush.msra.mxu0 0.0
      %298 = vmatpush.msra.mxu0 0.0
      %299 = vmatpush.msra.mxu0 0.0
      %300 = vmatpush.msra.mxu0 0.0
      %301 = vmatpush.msra.mxu0 %v214
      %302 = vmatmul.f32.gmra.mxu0 %v224
      %v303 = vpop.f32.mrf.mxu0
      %v304 = vadd.f32 %v220, %v303
      %305 = vdwg.mxu0
      %306 = vmatpush.msra.mxu0 0.0
      %307 = vmatpush.msra.mxu0 0.0
      %308 = vmatpush.msra.mxu0 0.0
      %309 = vmatpush.msra.mxu0 0.0
      %310 = vmatpush.msra.mxu0 0.0
      %311 = vmatpush.msra.mxu0 0.0
      %312 = vmatpush.msra.mxu0 0.0
      %313 = vmatpush.msra.mxu0 0.0
      %314 = vmatpush.msra.mxu0 0.0
      %315 = vmatpush.msra.mxu0 0.0
      %316 = vmatpush.msra.mxu0 0.0
      %317 = vmatpush.msra.mxu0 0.0
      %318 = vmatpush.msra.mxu0 0.0
      %319 = vmatpush.msra.mxu0 0.0
      %320 = vmatpush.msra.mxu0 0.0
      %321 = vmatpush.msra.mxu0 %v215
      %322 = vmatmul.f32.gmra.mxu0 %v224
      %v323 = vpop.f32.mrf.mxu0
      %v324 = vadd.f32 %v220, %v323
      %325 = vdwg.mxu0
      %v326 = vmax.f32 %v244, 0.0
      %v327 = vmax.f32 %v264, 0.0
      %v328 = vmax.f32 %v284, 0.0
      %v329 = vmax.f32 %v304, 0.0
      %v330 = vmax.f32 %v324, 0.0
      %331 = vst [vmem:[%s208] sm:$0xff] %v326
      %332 = vst [vmem:[%s208 + $0x8] sm:$0xff] %v327
      %333 = vst [vmem:[%s208 + $0x10] sm:$0xff] %v328
      %334 = vst [vmem:[%s208 + $0x18] sm:$0xff] %v329
      %335 = vst [vmem:[%s208 + $0x20] sm:$0xff] %v330
      %s336 = smul.u32 5, %s19
      %p337 = scmp.lt.s32.totalorder %s18, 1
      %s338 = scalar_select %p337, %s18, 1
      %p339 = scmp.lt.s32.totalorder %s336, 4
      %s340 = scalar_select %p339, %s336, 4
      %s341 = smul.addr %s338, 5
      %s342 = sadd.s32 %s340, %s341
      %s343 = smul.addr %s342, 8
      %s344 = scalar_lea.vmem %s3, %s343
      // Predicated region
      $region33: #{fourier_unit_forward.3} parent=31 // pred_check
        %p345 = pneg %p116
      $region34: #{fourier_unit_forward.3} parent=31 // pred_check_branch
        %347 = sbr.rel (%p345) target = $region36
      $region35: #{fourier_unit_forward.3} parent=31 // pred_region
        %s348 = smul.u32 5, %s19
      $region36: #{fourier_unit_forward.3} parent=31 // pred_fallthru
        _
    $region32: #{fourier_unit_forward.3} parent=5 // pred_fallthru
      _
    %p349 = scmp.le.s32.totalorder 2, %s9
    // Predicated region
    $region37: #{fourier_unit_forward.3} parent=5 // pred_check
      %p350 = pneg %p349
    $region38: #{fourier_unit_forward.3} parent=5 // pred_check_branch
      %352 = sbr.rel (%p350) target = $region40
    $region39: #{fourier_unit_forward.3} parent=5 // pred_region
      %s353 = ssub.s32 %s9, 2
      // Predicated region
      $region41: #{fourier_unit_forward.3} parent=39 // pred_check
        %p354 = pneg %p122
      $region42: #{fourier_unit_forward.3} parent=39 // pred_check_branch
        %356 = sbr.rel (%p354) target = $region44
      $region43: #{fourier_unit_forward.3} parent=39 // pred_region
        %s357 = smul.u32 5, %s21
        %p358 = scmp.lt.s32.totalorder %s20, 1
        %s359 = scalar_select %p358, %s20, 1
        %p360 = scmp.lt.s32.totalorder %s357, 4
        %s361 = scalar_select %p360, %s357, 4
        %s362 = smul.addr %s359, 5
        %s363 = sadd.s32 %s361, %s362
        %s364 = smul.addr %s363, 8
        %s365 = scalar_lea.vmem %s3, %s364
      $region44: #{fourier_unit_forward.3} parent=39 // pred_fallthru
        _
    $region40: #{fourier_unit_forward.3} parent=5 // pred_fallthru
      _
  $region6: #{fourier_unit_forward.3} parent=0 // loop_footer
    %s13 = sadd.s32 1, %s9
  $region7: #{fourier_unit_forward.3} parent=0 // loop_footer_branch
    %8 = sbr.rel target = $region3
  $region8: #{fourier_unit_forward.3} parent=0 // loop_exit
    _

// kernel: reverse.1
$region0: #{reverse.1}
  %s0 = inlined_call_operand.vmem [shape: f32[2,4,4,16,7], index: 0, kind: input, shape index: {}]
  %s1 = inlined_call_operand.vmem [shape: f32[2,4,4,16,7], index: 1, kind: output, shape index: {}]
  $region1: #{reverse.1} parent=0
    #allocation0 [shape = 'u8[262144]{0}', space=vmem, size = 0x40000, scoped, tag = 'operand span for operand 0']
    #allocation1 [shape = 'u8[131072]{0}', space=vmem, size = 0x20000, scoped, tag = 'operand span for operand 1']
    %s2 = scalar_lea.vmem [#allocation0], 8
    // Predicated region
    $region2: #{reverse.1} parent=1 // pred_check
      _
    $region3: #{reverse.1} parent=1 // pred_check_branch
      %4 = sbr.rel (0) target = $region5
    $region4: #{reverse.1} parent=1 // pred_region
      // Predicated region
      $region6: #{reverse.1} parent=4 // pred_check
        _
      $region7: #{reverse.1} parent=4 // pred_check_branch
        %6 = sbr.rel (0) target = $region9
      $region8: #{reverse.1} parent=4 // pred_region
        // Predicated region
        $region21: #{reverse.1} parent=8 // pred_check
          _
        $region22: #{reverse.1} parent=8 // pred_check_branch
          %84 = sbr.rel (0) target = $region24
        $region23: #{reverse.1} parent=8 // pred_region
          loop: start=0, step=1, limit=1
          $region25: #{reverse.1} parent=23 // loop_pre_header
            _
          $region26: #{reverse.1} parent=23 // loop_header
            %s86 = sphi 0, %s90
            %p87 = scmp.ge.s32.totalorder %s86, 1
            %s91 = sphi %s0, %s0
            %s92 = sphi %s2, %s2
          $region27: #{reverse.1} parent=23 // loop_header_branch
            %89 = sbr.rel (%p87) target = $region31
          $region28: #{reverse.1} parent=23 // loop_body
            %v93 = vld [vmem:[%s91] sm:$0xff]
            %94 = vst [vmem:[%s92] sm:$0xff] %v93
            %v95 = vld [vmem:[%s91 + $0x8] sm:$0xff]
            %96 = vst [vmem:[%s92 + $0x10] sm:$0xff] %v95
            %v97 = vld [vmem:[%s91 + $0x10] sm:$0xff]
            %98 = vst [vmem:[%s92 + $0x20] sm:$0xff] %v97
            %v99 = vld [vmem:[%s91 + $0x18] sm:$0xff]
            %100 = vst [vmem:[%s92 + $0x30] sm:$0xff] %v99
            %v101 = vld [vmem:[%s91 + $0x20] sm:$0xff]
            %102 = vst [vmem:[%s92 + $0x40] sm:$0xff] %v101
            %v103 = vld [vmem:[%s91 + $0x28] sm:$0xff]
            %104 = vst [vmem:[%s92 + $0x50] sm:$0xff] %v103
            %v105 = vld [vmem:[%s91 + $0x30] sm:$0xff]
            %106 = vst [vmem:[%s92 + $0x60] sm:$0xff] %v105
            %v107 = vld [vmem:[%s91 + $0x38] sm:$0xff]
            %108 = vst [vmem:[%s92 + $0x70] sm:$0xff] %v107
            %v109 = vld [vmem:[%s91 + $0x40] sm:$0xff]
            %110 = vst [vmem:[%s92 + $0x80] sm:$0xff] %v109
            %v111 = vld [vmem:[%s91 + $0x48] sm:$0xff]
            %112 = vst [vmem:[%s92 + $0x90] sm:$0xff] %v111
            %v113 = vld [vmem:[%s91 + $0x50] sm:$0xff]
            %114 = vst [vmem:[%s92 + $0xa0] sm:$0xff] %v113
            %v115 = vld [vmem:[%s91 + $0x58] sm:$0xff]
            %116 = vst [vmem:[%s92 + $0xb0] sm:$0xff] %v115
            %v117 = vld [vmem:[%s91 + $0x60] sm:$0xff]
            %118 = vst [vmem:[%s92 + $0xc0] sm:$0xff] %v117
            %v119 = vld [vmem:[%s91 + $0x68] sm:$0xff]
            %120 = vst [vmem:[%s92 + $0xd0] sm:$0xff] %v119
            %v121 = vld [vmem:[%s91 + $0x70] sm:$0xff]
            %122 = vst [vmem:[%s92 + $0xe0] sm:$0xff] %v121
            %v123 = vld [vmem:[%s91 + $0x78] sm:$0xff]
            %124 = vst [vmem:[%s92 + $0xf0] sm:$0xff] %v123
            %v125 = vld [vmem:[%s91 + $0x80] sm:$0xff]
            %126 = vst [vmem:[%s92 + $0x100] sm:$0xff] %v125
            %v127 = vld [vmem:[%s91 + $0x88] sm:$0xff]
            %128 = vst [vmem:[%s92 + $0x110] sm:$0xff] %v127
            %v129 = vld [vmem:[%s91 + $0x90] sm:$0xff]
            %130 = vst [vmem:[%s92 + $0x120] sm:$0xff] %v129
            %v131 = vld [vmem:[%s91 + $0x98] sm:$0xff]
            %132 = vst [vmem:[%s92 + $0x130] sm:$0xff] %v131
            %v133 = vld [vmem:[%s91 + $0xa0] sm:$0xff]
            %134 = vst [vmem:[%s92 + $0x140] sm:$0xff] %v133
            %v135 = vld [vmem:[%s91 + $0xa8] sm:$0xff]
            %136 = vst [vmem:[%s92 + $0x150] sm:$0xff] %v135
            %v137 = vld [vmem:[%s91 + $0xb0] sm:$0xff]
            %138 = vst [vmem:[%s92 + $0x160] sm:$0xff] %v137
            %v139 = vld [vmem:[%s91 + $0xb8] sm:$0xff]
            %140 = vst [vmem:[%s92 + $0x170] sm:$0xff] %v139
            %v141 = vld [vmem:[%s91 + $0xc0] sm:$0xff]
            %142 = vst [vmem:[%s92 + $0x180] sm:$0xff] %v141
            %v143 = vld [vmem:[%s91 + $0xc8] sm:$0xff]
            %144 = vst [vmem:[%s92 + $0x190] sm:$0xff] %v143
            %v145 = vld [vmem:[%s91 + $0xd0] sm:$0xff]
            %146 = vst [vmem:[%s92 + $0x1a0] sm:$0xff] %v145
            %v147 = vld [vmem:[%s91 + $0xd8] sm:$0xff]
            %148 = vst [vmem:[%s92 + $0x1b0] sm:$0xff] %v147
            %v149 = vld [vmem:[%s91 + $0xe0] sm:$0xff]
            %150 = vst [vmem:[%s92 + $0x1c0] sm:$0xff] %v149
            %v151 = vld [vmem:[%s91 + $0xe8] sm:$0xff]
            %152 = vst [vmem:[%s92 + $0x1d0] sm:$0xff] %v151
            %v153 = vld [vmem:[%s91 + $0xf0] sm:$0xff]
            %154 = vst [vmem:[%s92 + $0x1e0] sm:$0xff] %v153
            %v155 = vld [vmem:[%s91 + $0xf8] sm:$0xff]
            %156 = vst [vmem:[%s92 + $0x1f0] sm:$0xff] %v155
          $region29: #{reverse.1} parent=23 // loop_footer
            %s90 = sadd.s32 1, %s86
          $region30: #{reverse.1} parent=23 // loop_footer_branch
            %85 = sbr.rel target = $region26
          $region31: #{reverse.1} parent=23 // loop_exit
            _
        $region24: #{reverse.1} parent=8 // pred_fallthru
          _
        // Predicated region
        $region32: #{reverse.1} parent=8 // pred_check
          _
        $region33: #{reverse.1} parent=8 // pred_check_branch
          %158 = sbr.rel target = $region35
        $region34: #{reverse.1} parent=8 // pred_region
          _
        $region35: #{reverse.1} parent=8 // pred_fallthru
          _
      $region9: #{reverse.1} parent=4 // pred_fallthru
        _
      // Predicated region
      $region10: #{reverse.1} parent=4 // pred_check
        _
      $region11: #{reverse.1} parent=4 // pred_check_branch
        %8 = sbr.rel target = $region13
      $region12: #{reverse.1} parent=4 // pred_region
        %s10 = ssub.s32 256, 1
        loop: start=0, step=1, limit=1
        $region14: #{reverse.1} parent=12 // loop_pre_header
          _
        $region15: #{reverse.1} parent=12 // loop_header
          %s12 = sphi 0, %s16
          %p13 = scmp.ge.s32.totalorder %s12, 1
          %s17 = sphi %s0, %s0
          %s18 = sphi %s2, %s2
        $region16: #{reverse.1} parent=12 // loop_header_branch
          %15 = sbr.rel (%p13) target = $region20
        $region17: #{reverse.1} parent=12 // loop_body
          %v19 = vld [vmem:[%s17] sm:%s10]
          %20 = vst [vmem:[%s18] sm:%s10] %v19
          %v21 = vld [vmem:[%s17 + $0x8] sm:%s10]
          %22 = vst [vmem:[%s18 + $0x10] sm:%s10] %v21
          %v23 = vld [vmem:[%s17 + $0x10] sm:%s10]
          %24 = vst [vmem:[%s18 + $0x20] sm:%s10] %v23
          %v25 = vld [vmem:[%s17 + $0x18] sm:%s10]
          %26 = vst [vmem:[%s18 + $0x30] sm:%s10] %v25
          %v27 = vld [vmem:[%s17 + $0x20] sm:%s10]
          %28 = vst [vmem:[%s18 + $0x40] sm:%s10] %v27
          %v29 = vld [vmem:[%s17 + $0x28] sm:%s10]
          %30 = vst [vmem:[%s18 + $0x50] sm:%s10] %v29
          %v31 = vld [vmem:[%s17 + $0x30] sm:%s10]
          %32 = vst [vmem:[%s18 + $0x60] sm:%s10] %v31
          %v33 = vld [vmem:[%s17 + $0x38] sm:%s10]
          %34 = vst [vmem:[%s18 + $0x70] sm:%s10] %v33
          %v35 = vld [vmem:[%s17 + $0x40] sm:%s10]
          %36 = vst [vmem:[%s18 + $0x80] sm:%s10] %v35
          %v37 = vld [vmem:[%s17 + $0x48] sm:%s10]
          %38 = vst [vmem:[%s18 + $0x90] sm:%s10] %v37
          %v39 = vld [vmem:[%s17 + $0x50] sm:%s10]
          %40 = vst [vmem:[%s18 + $0xa0] sm:%s10] %v39
          %v41 = vld [vmem:[%s17 + $0x58] sm:%s10]
          %42 = vst [vmem:[%s18 + $0xb0] sm:%s10] %v41
          %v43 = vld [vmem:[%s17 + $0x60] sm:%s10]
          %44 = vst [vmem:[%s18 + $0xc0] sm:%s10] %v43
          %v45 = vld [vmem:[%s17 + $0x68] sm:%s10]
          %46 = vst [vmem:[%s18 + $0xd0] sm:%s10] %v45
          %v47 = vld [vmem:[%s17 + $0x70] sm:%s10]
          %48 = vst [vmem:[%s18 + $0xe0] sm:%s10] %v47
          %v49 = vld [vmem:[%s17 + $0x78] sm:%s10]
          %50 = vst [vmem:[%s18 + $0xf0] sm:%s10] %v49
          %v51 = vld [vmem:[%s17 + $0x80] sm:%s10]
          %52 = vst [vmem:[%s18 + $0x100] sm:%s10] %v51
          %v53 = vld [vmem:[%s17 + $0x88] sm:%s10]
          %54 = vst [vmem:[%s18 + $0x110] sm:%s10] %v53
          %v55 = vld [vmem:[%s17 + $0x90] sm:%s10]
          %56 = vst [vmem:[%s18 + $0x120] sm:%s10] %v55
          %v57 = vld [vmem:[%s17 + $0x98] sm:%s10]
          %58 = vst [vmem:[%s18 + $0x130] sm:%s10] %v57
          %v59 = vld [vmem:[%s17 + $0xa0] sm:%s10]
          %60 = vst [vmem:[%s18 + $0x140] sm:%s10] %v59
          %v61 = vld [vmem:[%s17 + $0xa8] sm:%s10]
          %62 = vst [vmem:[%s18 + $0x150] sm:%s10] %v61
          %v63 = vld [vmem:[%s17 + $0xb0] sm:%s10]
          %64 = vst [vmem:[%s18 + $0x160] sm:%s10] %v63
          %v65 = vld [vmem:[%s17 + $0xb8] sm:%s10]
          %66 = vst [vmem:[%s18 + $0x170] sm:%s10] %v65
          %v67 = vld [vmem:[%s17 + $0xc0] sm:%s10]
          %68 = vst [vmem:[%s18 + $0x180] sm:%s10] %v67
          %v69 = vld [vmem:[%s17 + $0xc8] sm:%s10]
          %70 = vst [vmem:[%s18 + $0x190] sm:%s10] %v69
          %v71 = vld [vmem:[%s17 + $0xd0] sm:%s10]
          %72 = vst [vmem:[%s18 + $0x1a0] sm:%s10] %v71
          %v73 = vld [vmem:[%s17 + $0xd8] sm:%s10]
          %74 = vst [vmem:[%s18 + $0x1b0] sm:%s10] %v73
          %v75 = vld [vmem:[%s17 + $0xe0] sm:%s10]
          %76 = vst [vmem:[%s18 + $0x1c0] sm:%s10] %v75
          %v77 = vld [vmem:[%s17 + $0xe8] sm:%s10]
          %78 = vst [vmem:[%s18 + $0x1d0] sm:%s10] %v77
          %v79 = vld [vmem:[%s17 + $0xf0] sm:%s10]
          %80 = vst [vmem:[%s18 + $0x1e0] sm:%s10] %v79
          %v81 = vld [vmem:[%s17 + $0xf8] sm:%s10]
          %82 = vst [vmem:[%s18 + $0x1f0] sm:%s10] %v81
        $region18: #{reverse.1} parent=12 // loop_footer
          %s16 = sadd.s32 1, %s12
        $region19: #{reverse.1} parent=12 // loop_footer_branch
          %11 = sbr.rel target = $region15
        $region20: #{reverse.1} parent=12 // loop_exit
          _
      $region13: #{reverse.1} parent=4 // pred_fallthru
        _
    $region5: #{reverse.1} parent=1 // pred_fallthru
      _
    %159 = vnop
    %s160 = scalar_lea.vmem [#allocation0], 7
    %v161 = vld [vmem:[%s160] ss:$-1 sm:$0xff]
    %v162 = vrot.slane %v161, 1
    %163 = vst [vmem:[#allocation1] sm:$0xff] %v162
    %s164 = scalar_lea.vmem [#allocation0], 8
    %s165 = scalar_lea.vmem %s164, 7 [#allocation0]
    %v166 = vld [vmem:[%s165] ss:$-1 sm:$0xff]
    %v167 = vrot.slane %v166, 1
    %v168 = vlaneseq
    %v169 = vshrl.u32 %v168, 7
    %vm170 = vcmp.lt.s32.totalorder %v169, 7
    %171 = vst.msk [vmem:[#allocation1] sm:$0xff] %vm170, %v167
    %s172 = scalar_lea.vmem [#allocation1], 8
    %s173 = scalar_lea.vmem [#allocation0], 16
    %s174 = scalar_lea.vmem %s173, 7 [#allocation0]
    %v175 = vld [vmem:[%s174] ss:$-1 sm:$0xff]
    %v176 = vrot.slane %v175, 1
    %177 = vst [vmem:[%s172] sm:$0xff] %v176
    %s178 = scalar_lea.vmem %s173, 8 [#allocation0]
    %s179 = scalar_lea.vmem %s178, 7 [#allocation0]
    %v180 = vld [vmem:[%s179] ss:$-1 sm:$0xff]
    %v181 = vrot.slane %v180, 1
    %v182 = vlaneseq
    %v183 = vshrl.u32 %v182, 7
    %vm184 = vcmp.lt.s32.totalorder %v183, 7
    %185 = vst.msk [vmem:[%s172] sm:$0xff] %vm184, %v181
    %s186 = scalar_lea.vmem [#allocation1], 16
    %s187 = scalar_lea.vmem [#allocation0], 32
    %s188 = scalar_lea.vmem %s187, 7 [#allocation0]
    %v189 = vld [vmem:[%s188] ss:$-1 sm:$0xff]
    %v190 = vrot.slane %v189, 1
    %191 = vst [vmem:[%s186] sm:$0xff] %v190
    %s192 = scalar_lea.vmem %s187, 8 [#allocation0]
    %s193 = scalar_lea.vmem %s192, 7 [#allocation0]
    %v194 = vld [vmem:[%s193] ss:$-1 sm:$0xff]
    %v195 = vrot.slane %v194, 1
    %v196 = vlaneseq
    %v197 = vshrl.u32 %v196, 7
    %vm198 = vcmp.lt.s32.totalorder %v197, 7
    %199 = vst.msk [vmem:[%s186] sm:$0xff] %vm198, %v195
    %s200 = scalar_lea.vmem [#allocation1], 24
    %s201 = scalar_lea.vmem [#allocation0], 48
    %s202 = scalar_lea.vmem %s201, 7 [#allocation0]
    %v203 = vld [vmem:[%s202] ss:$-1 sm:$0xff]
    %v204 = vrot.slane %v203, 1
    %205 = vst [vmem:[%s200] sm:$0xff] %v204
    %s206 = scalar_lea.vmem %s201, 8 [#allocation0]
    %s207 = scalar_lea.vmem %s206, 7 [#allocation0]
    %v208 = vld [vmem:[%s207] ss:$-1 sm:$0xff]
    %v209 = vrot.slane %v208, 1
    %v210 = vlaneseq
    %v211 = vshrl.u32 %v210, 7
    %vm212 = vcmp.lt.s32.totalorder %v211, 7
    %213 = vst.msk [vmem:[%s200] sm:$0xff] %vm212, %v209
    %s214 = scalar_lea.vmem [#allocation1], 32
    %s215 = scalar_lea.vmem [#allocation0], 64
    %s216 = scalar_lea.vmem %s215, 7 [#allocation0]
    %v217 = vld [vmem:[%s216] ss:$-1 sm:$0xff]
    %v218 = vrot.slane %v217, 1
    %219 = vst [vmem:[%s214] sm:$0xff] %v218
    %s220 = scalar_lea.vmem %s215, 8 [#allocation0]
    %s221 = scalar_lea.vmem %s220, 7 [#allocation0]
    %v222 = vld [vmem:[%s221] ss:$-1 sm:$0xff]
    %v223 = vrot.slane %v222, 1
    %v224 = vlaneseq
    %v225 = vshrl.u32 %v224, 7
    %vm226 = vcmp.lt.s32.totalorder %v225, 7
    %227 = vst.msk [vmem:[%s214] sm:$0xff] %vm226, %v223
    %s228 = scalar_lea.vmem [#allocation1], 40
    %s229 = scalar_lea.vmem [#allocation0], 80
    %s230 = scalar_lea.vmem %s229, 7 [#allocation0]
    %v231 = vld [vmem:[%s230] ss:$-1 sm:$0xff]
    %v232 = vrot.slane %v231, 1
    %233 = vst [vmem:[%s228] sm:$0xff] %v232
    %s234 = scalar_lea.vmem %s229, 8 [#allocation0]
    %s235 = scalar_lea.vmem %s234, 7 [#allocation0]
    %v236 = vld [vmem:[%s235] ss:$-1 sm:$0xff]
    %v237 = vrot.slane %v236, 1
    %v238 = vlaneseq
    %v239 = vshrl.u32 %v238, 7
    %vm240 = vcmp.lt.s32.totalorder %v239, 7
    %241 = vst.msk [vmem:[%s228] sm:$0xff] %vm240, %v237
    %s242 = scalar_lea.vmem [#allocation1], 48
    %s243 = scalar_lea.vmem [#allocation0], 96
    %s244 = scalar_lea.vmem %s243, 7 [#allocation0]
    %v245 = vld [vmem:[%s244] ss:$-1 sm:$0xff]
    %v246 = vrot.slane %v245, 1
    %247 = vst [vmem:[%s242] sm:$0xff] %v246
    %s248 = scalar_lea.vmem %s243, 8 [#allocation0]
    %s249 = scalar_lea.vmem %s248, 7 [#allocation0]
    %v250 = vld [vmem:[%s249] ss:$-1 sm:$0xff]
    %v251 = vrot.slane %v250, 1
    %v252 = vlaneseq
    %v253 = vshrl.u32 %v252, 7
    %vm254 = vcmp.lt.s32.totalorder %v253, 7
    %255 = vst.msk [vmem:[%s242] sm:$0xff] %vm254, %v251
    %s256 = scalar_lea.vmem [#allocation1], 56
    %s257 = scalar_lea.vmem [#allocation0], 112
    %s258 = scalar_lea.vmem %s257, 7 [#allocation0]
    %v259 = vld [vmem:[%s258] ss:$-1 sm:$0xff]
    %v260 = vrot.slane %v259, 1
    %261 = vst [vmem:[%s256] sm:$0xff] %v260
    %s262 = scalar_lea.vmem %s257, 8 [#allocation0]
    %s263 = scalar_lea.vmem %s262, 7 [#allocation0]
    %v264 = vld [vmem:[%s263] ss:$-1 sm:$0xff]
    %v265 = vrot.slane %v264, 1
    %v266 = vlaneseq
    %v267 = vshrl.u32 %v266, 7
    %vm268 = vcmp.lt.s32.totalorder %v267, 7
    %269 = vst.msk [vmem:[%s256] sm:$0xff] %vm268, %v265
    %s270 = scalar_lea.vmem [#allocation1], 64
    %s271 = scalar_lea.vmem [#allocation0], 128
    %s272 = scalar_lea.vmem %s271, 7 [#allocation0]
    %v273 = vld [vmem:[%s272] ss:$-1 sm:$0xff]
    %v274 = vrot.slane %v273, 1
    %275 = vst [vmem:[%s270] sm:$0xff] %v274
    %s276 = scalar_lea.vmem %s271, 8 [#allocation0]
    %s277 = scalar_lea.vmem %s276, 7 [#allocation0]
    %v278 = vld [vmem:[%s277] ss:$-1 sm:$0xff]
    %v279 = vrot.slane %v278, 1
    %v280 = vlaneseq
    %v281 = vshrl.u32 %v280, 7
    %vm282 = vcmp.lt.s32.totalorder %v281, 7
    %283 = vst.msk [vmem:[%s270] sm:$0xff] %vm282, %v279
    %s284 = scalar_lea.vmem [#allocation1], 72
    %s285 = scalar_lea.vmem [#allocation0], 144
    %s286 = scalar_lea.vmem %s285, 7 [#allocation0]
    %v287 = vld [vmem:[%s286] ss:$-1 sm:$0xff]
    %v288 = vrot.slane %v287, 1
    %289 = vst [vmem:[%s284] sm:$0xff] %v288
    %s290 = scalar_lea.vmem %s285, 8 [#allocation0]
    %s291 = scalar_lea.vmem %s290, 7 [#allocation0]
    %v292 = vld [vmem:[%s291] ss:$-1 sm:$0xff]
    %v293 = vrot.slane %v292, 1
    %v294 = vlaneseq
    %v295 = vshrl.u32 %v294, 7
    %vm296 = vcmp.lt.s32.totalorder %v295, 7
    %297 = vst.msk [vmem:[%s284] sm:$0xff] %vm296, %v293
    %s298 = scalar_lea.vmem [#allocation1], 80
    %s299 = scalar_lea.vmem [#allocation0], 160
    %s300 = scalar_lea.vmem %s299, 7 [#allocation0]
    %v301 = vld [vmem:[%s300] ss:$-1 sm:$0xff]
    %v302 = vrot.slane %v301, 1
    %303 = vst [vmem:[%s298] sm:$0xff] %v302
    %s304 = scalar_lea.vmem %s299, 8 [#allocation0]
    %s305 = scalar_lea.vmem %s304, 7 [#allocation0]
    %v306 = vld [vmem:[%s305] ss:$-1 sm:$0xff]
    %v307 = vrot.slane %v306, 1
    %v308 = vlaneseq
    %v309 = vshrl.u32 %v308, 7
    %vm310 = vcmp.lt.s32.totalorder %v309, 7
    %311 = vst.msk [vmem:[%s298] sm:$0xff] %vm310, %v307
    %s312 = scalar_lea.vmem [#allocation1], 88
    %s313 = scalar_lea.vmem [#allocation0], 176
    %s314 = scalar_lea.vmem %s313, 7 [#allocation0]
    %v315 = vld [vmem:[%s314] ss:$-1 sm:$0xff]
    %v316 = vrot.slane %v315, 1
    %317 = vst [vmem:[%s312] sm:$0xff] %v316
    %s318 = scalar_lea.vmem %s313, 8 [#allocation0]
    %s319 = scalar_lea.vmem %s318, 7 [#allocation0]
    %v320 = vld [vmem:[%s319] ss:$-1 sm:$0xff]
    %v321 = vrot.slane %v320, 1
    %v322 = vlaneseq
    %v323 = vshrl.u32 %v322, 7
    %vm324 = vcmp.lt.s32.totalorder %v323, 7
    %325 = vst.msk [vmem:[%s312] sm:$0xff] %vm324, %v321
    %s326 = scalar_lea.vmem [#allocation1], 96
    %s327 = scalar_lea.vmem [#allocation0], 192
    %s328 = scalar_lea.vmem %s327, 7 [#allocation0]
    %v329 = vld [vmem:[%s328] ss:$-1 sm:$0xff]
    %v330 = vrot.slane %v329, 1
    %331 = vst [vmem:[%s326] sm:$0xff] %v330
    %s332 = scalar_lea.vmem %s327, 8 [#allocation0]
    %s333 = scalar_lea.vmem %s332, 7 [#allocation0]
    %v334 = vld [vmem:[%s333] ss:$-1 sm:$0xff]
    %v335 = vrot.slane %v334, 1
    %v336 = vlaneseq
    %v337 = vshrl.u32 %v336, 7
    %vm338 = vcmp.lt.s32.totalorder %v337, 7
    %339 = vst.msk [vmem:[%s326] sm:$0xff] %vm338, %v335
    %s340 = scalar_lea.vmem [#allocation1], 104
    %s341 = scalar_lea.vmem [#allocation0], 208
    %s342 = scalar_lea.vmem %s341, 7 [#allocation0]
    %v343 = vld [vmem:[%s342] ss:$-1 sm:$0xff]
    %v344 = vrot.slane %v343, 1
    %345 = vst [vmem:[%s340] sm:$0xff] %v344
    %s346 = scalar_lea.vmem %s341, 8 [#allocation0]
    %s347 = scalar_lea.vmem %s346, 7 [#allocation0]
    %v348 = vld [vmem:[%s347] ss:$-1 sm:$0xff]
    %v349 = vrot.slane %v348, 1
    %v350 = vlaneseq
    %v351 = vshrl.u32 %v350, 7
    %vm352 = vcmp.lt.s32.totalorder %v351, 7
    %353 = vst.msk [vmem:[%s340] sm:$0xff] %vm352, %v349
    %s354 = scalar_lea.vmem [#allocation1], 112
    %s355 = scalar_lea.vmem [#allocation0], 224
    %s356 = scalar_lea.vmem %s355, 7 [#allocation0]
    %v357 = vld [vmem:[%s356] ss:$-1 sm:$0xff]
    %v358 = vrot.slane %v357, 1
    %359 = vst [vmem:[%s354] sm:$0xff] %v358
    %s360 = scalar_lea.vmem %s355, 8 [#allocation0]
    %s361 = scalar_lea.vmem %s360, 7 [#allocation0]
    %v362 = vld [vmem:[%s361] ss:$-1 sm:$0xff]
    %v363 = vrot.slane %v362, 1
    %v364 = vlaneseq
    %v365 = vshrl.u32 %v364, 7
    %vm366 = vcmp.lt.s32.totalorder %v365, 7
    %367 = vst.msk [vmem:[%s354] sm:$0xff] %vm366, %v363
    %s368 = scalar_lea.vmem [#allocation1], 120
    %s369 = scalar_lea.vmem [#allocation0], 240
    %s370 = scalar_lea.vmem %s369, 7 [#allocation0]
    %v371 = vld [vmem:[%s370] ss:$-1 sm:$0xff]
    %v372 = vrot.slane %v371, 1
    %373 = vst [vmem:[%s368] sm:$0xff] %v372
    %s374 = scalar_lea.vmem %s369, 8 [#allocation0]
    %s375 = scalar_lea.vmem %s374, 7 [#allocation0]
    %v376 = vld [vmem:[%s375] ss:$-1 sm:$0xff]
    %v377 = vrot.slane %v376, 1
    %v378 = vlaneseq
    %v379 = vshrl.u32 %v378, 7
    %vm380 = vcmp.lt.s32.totalorder %v379, 7
    %381 = vst.msk [vmem:[%s368] sm:$0xff] %vm380, %v377
    %s382 = scalar_lea.vmem [#allocation1], 128
    %s383 = scalar_lea.vmem [#allocation0], 256
    %s384 = scalar_lea.vmem %s383, 7 [#allocation0]
    %v385 = vld [vmem:[%s384] ss:$-1 sm:$0xff]
    %v386 = vrot.slane %v385, 1
    %387 = vst [vmem:[%s382] sm:$0xff] %v386
    %s388 = scalar_lea.vmem %s383, 8 [#allocation0]
    %s389 = scalar_lea.vmem %s388, 7 [#allocation0]
    %v390 = vld [vmem:[%s389] ss:$-1 sm:$0xff]
    %v391 = vrot.slane %v390, 1
    %v392 = vlaneseq
    %v393 = vshrl.u32 %v392, 7
    %vm394 = vcmp.lt.s32.totalorder %v393, 7
    %395 = vst.msk [vmem:[%s382] sm:$0xff] %vm394, %v391
    %s396 = scalar_lea.vmem [#allocation1], 136
    %s397 = scalar_lea.vmem [#allocation0], 272
    %s398 = scalar_lea.vmem %s397, 7 [#allocation0]
    %v399 = vld [vmem:[%s398] ss:$-1 sm:$0xff]
    %v400 = vrot.slane %v399, 1
    %401 = vst [vmem:[%s396] sm:$0xff] %v400
    %s402 = scalar_lea.vmem %s397, 8 [#allocation0]
    %s403 = scalar_lea.vmem %s402, 7 [#allocation0]
    %v404 = vld [vmem:[%s403] ss:$-1 sm:$0xff]
    %v405 = vrot.slane %v404, 1
    %v406 = vlaneseq
    %v407 = vshrl.u32 %v406, 7
    %vm408 = vcmp.lt.s32.totalorder %v407, 7
    %409 = vst.msk [vmem:[%s396] sm:$0xff] %vm408, %v405
    %s410 = scalar_lea.vmem [#allocation1], 144
    %s411 = scalar_lea.vmem [#allocation0], 288
    %s412 = scalar_lea.vmem %s411, 7 [#allocation0]
    %v413 = vld [vmem:[%s412] ss:$-1 sm:$0xff]
    %v414 = vrot.slane %v413, 1
    %415 = vst [vmem:[%s410] sm:$0xff] %v414
    %s416 = scalar_lea.vmem %s411, 8 [#allocation0]
    %s417 = scalar_lea.vmem %s416, 7 [#allocation0]
    %v418 = vld [vmem:[%s417] ss:$-1 sm:$0xff]
    %v419 = vrot.slane %v418, 1
    %v420 = vlaneseq
    %v421 = vshrl.u32 %v420, 7
    %vm422 = vcmp.lt.s32.totalorder %v421, 7
    %423 = vst.msk [vmem:[%s410] sm:$0xff] %vm422, %v419
    %s424 = scalar_lea.vmem [#allocation1], 152
    %s425 = scalar_lea.vmem [#allocation0], 304
    %s426 = scalar_lea.vmem %s425, 7 [#allocation0]
    %v427 = vld [vmem:[%s426] ss:$-1 sm:$0xff]
    %v428 = vrot.slane %v427, 1
    %429 = vst [vmem:[%s424] sm:$0xff] %v428
    %s430 = scalar_lea.vmem %s425, 8 [#allocation0]
    %s431 = scalar_lea.vmem %s430, 7 [#allocation0]
    %v432 = vld [vmem:[%s431] ss:$-1 sm:$0xff]
    %v433 = vrot.slane %v432, 1
    %v434 = vlaneseq
    %v435 = vshrl.u32 %v434, 7
    %vm436 = vcmp.lt.s32.totalorder %v435, 7
    %437 = vst.msk [vmem:[%s424] sm:$0xff] %vm436, %v433
    %s438 = scalar_lea.vmem [#allocation1], 160
    %s439 = scalar_lea.vmem [#allocation0], 320
    %s440 = scalar_lea.vmem %s439, 7 [#allocation0]
    %v441 = vld [vmem:[%s440] ss:$-1 sm:$0xff]
    %v442 = vrot.slane %v441, 1
    %443 = vst [vmem:[%s438] sm:$0xff] %v442
    %s444 = scalar_lea.vmem %s439, 8 [#allocation0]
    %s445 = scalar_lea.vmem %s444, 7 [#allocation0]
    %v446 = vld [vmem:[%s445] ss:$-1 sm:$0xff]
    %v447 = vrot.slane %v446, 1
    %v448 = vlaneseq
    %v449 = vshrl.u32 %v448, 7
    %vm450 = vcmp.lt.s32.totalorder %v449, 7
    %451 = vst.msk [vmem:[%s438] sm:$0xff] %vm450, %v447
    %s452 = scalar_lea.vmem [#allocation1], 168
    %s453 = scalar_lea.vmem [#allocation0], 336
    %s454 = scalar_lea.vmem %s453, 7 [#allocation0]
    %v455 = vld [vmem:[%s454] ss:$-1 sm:$0xff]
    %v456 = vrot.slane %v455, 1
    %457 = vst [vmem:[%s452] sm:$0xff] %v456
    %s458 = scalar_lea.vmem %s453, 8 [#allocation0]
    %s459 = scalar_lea.vmem %s458, 7 [#allocation0]
    %v460 = vld [vmem:[%s459] ss:$-1 sm:$0xff]
    %v461 = vrot.slane %v460, 1
    %v462 = vlaneseq
    %v463 = vshrl.u32 %v462, 7
    %vm464 = vcmp.lt.s32.totalorder %v463, 7
    %465 = vst.msk [vmem:[%s452] sm:$0xff] %vm464, %v461
    %s466 = scalar_lea.vmem [#allocation1], 176
    %s467 = scalar_lea.vmem [#allocation0], 352
    %s468 = scalar_lea.vmem %s467, 7 [#allocation0]
    %v469 = vld [vmem:[%s468] ss:$-1 sm:$0xff]
    %v470 = vrot.slane %v469, 1
    %471 = vst [vmem:[%s466] sm:$0xff] %v470
    %s472 = scalar_lea.vmem %s467, 8 [#allocation0]
    %s473 = scalar_lea.vmem %s472, 7 [#allocation0]
    %v474 = vld [vmem:[%s473] ss:$-1 sm:$0xff]
    %v475 = vrot.slane %v474, 1
    %v476 = vlaneseq
    %v477 = vshrl.u32 %v476, 7
    %vm478 = vcmp.lt.s32.totalorder %v477, 7
    %479 = vst.msk [vmem:[%s466] sm:$0xff] %vm478, %v475
    %s480 = scalar_lea.vmem [#allocation1], 184
    %s481 = scalar_lea.vmem [#allocation0], 368
    %s482 = scalar_lea.vmem %s481, 7 [#allocation0]
    %v483 = vld [vmem:[%s482] ss:$-1 sm:$0xff]
    %v484 = vrot.slane %v483, 1
    %485 = vst [vmem:[%s480] sm:$0xff] %v484
    %s486 = scalar_lea.vmem %s481, 8 [#allocation0]
    %s487 = scalar_lea.vmem %s486, 7 [#allocation0]
    %v488 = vld [vmem:[%s487] ss:$-1 sm:$0xff]
    %v489 = vrot.slane %v488, 1
    %v490 = vlaneseq
    %v491 = vshrl.u32 %v490, 7
    %vm492 = vcmp.lt.s32.totalorder %v491, 7
    %493 = vst.msk [vmem:[%s480] sm:$0xff] %vm492, %v489
    %s494 = scalar_lea.vmem [#allocation1], 192
    %s495 = scalar_lea.vmem [#allocation0], 384
    %s496 = scalar_lea.vmem %s495, 7 [#allocation0]
    %v497 = vld [vmem:[%s496] ss:$-1 sm:$0xff]
    %v498 = vrot.slane %v497, 1
    %499 = vst [vmem:[%s494] sm:$0xff] %v498
    %s500 = scalar_lea.vmem %s495, 8 [#allocation0]
    %s501 = scalar_lea.vmem %s500, 7 [#allocation0]
    %v502 = vld [vmem:[%s501] ss:$-1 sm:$0xff]
    %v503 = vrot.slane %v502, 1
    %v504 = vlaneseq
    %v505 = vshrl.u32 %v504, 7
    %vm506 = vcmp.lt.s32.totalorder %v505, 7
    %507 = vst.msk [vmem:[%s494] sm:$0xff] %vm506, %v503
    %s508 = scalar_lea.vmem [#allocation1], 200
    %s509 = scalar_lea.vmem [#allocation0], 400
    %s510 = scalar_lea.vmem %s509, 7 [#allocation0]
    %v511 = vld [vmem:[%s510] ss:$-1 sm:$0xff]
    %v512 = vrot.slane %v511, 1
    %513 = vst [vmem:[%s508] sm:$0xff] %v512
    %s514 = scalar_lea.vmem %s509, 8 [#allocation0]
    %s515 = scalar_lea.vmem %s514, 7 [#allocation0]
    %v516 = vld [vmem:[%s515] ss:$-1 sm:$0xff]
    %v517 = vrot.slane %v516, 1
    %v518 = vlaneseq
    %v519 = vshrl.u32 %v518, 7
    %vm520 = vcmp.lt.s32.totalorder %v519, 7
    %521 = vst.msk [vmem:[%s508] sm:$0xff] %vm520, %v517
    %s522 = scalar_lea.vmem [#allocation1], 208
    %s523 = scalar_lea.vmem [#allocation0], 416
    %s524 = scalar_lea.vmem %s523, 7 [#allocation0]
    %v525 = vld [vmem:[%s524] ss:$-1 sm:$0xff]
    %v526 = vrot.slane %v525, 1
    %527 = vst [vmem:[%s522] sm:$0xff] %v526
    %s528 = scalar_lea.vmem %s523, 8 [#allocation0]
    %s529 = scalar_lea.vmem %s528, 7 [#allocation0]
    %v530 = vld [vmem:[%s529] ss:$-1 sm:$0xff]
    %v531 = vrot.slane %v530, 1
    %v532 = vlaneseq
    %v533 = vshrl.u32 %v532, 7
    %vm534 = vcmp.lt.s32.totalorder %v533, 7
    %535 = vst.msk [vmem:[%s522] sm:$0xff] %vm534, %v531
    %s536 = scalar_lea.vmem [#allocation1], 216
    %s537 = scalar_lea.vmem [#allocation0], 432
    %s538 = scalar_lea.vmem %s537, 7 [#allocation0]
    %v539 = vld [vmem:[%s538] ss:$-1 sm:$0xff]
    %v540 = vrot.slane %v539, 1
    %541 = vst [vmem:[%s536] sm:$0xff] %v540
    %s542 = scalar_lea.vmem %s537, 8 [#allocation0]
    %s543 = scalar_lea.vmem %s542, 7 [#allocation0]
    %v544 = vld [vmem:[%s543] ss:$-1 sm:$0xff]
    %v545 = vrot.slane %v544, 1
    %v546 = vlaneseq
    %v547 = vshrl.u32 %v546, 7
    %vm548 = vcmp.lt.s32.totalorder %v547, 7
    %549 = vst.msk [vmem:[%s536] sm:$0xff] %vm548, %v545
    %s550 = scalar_lea.vmem [#allocation1], 224
    %s551 = scalar_lea.vmem [#allocation0], 448
    %s552 = scalar_lea.vmem %s551, 7 [#allocation0]
    %v553 = vld [vmem:[%s552] ss:$-1 sm:$0xff]
    %v554 = vrot.slane %v553, 1
    %555 = vst [vmem:[%s550] sm:$0xff] %v554
    %s556 = scalar_lea.vmem %s551, 8 [#allocation0]
    %s557 = scalar_lea.vmem %s556, 7 [#allocation0]
    %v558 = vld [vmem:[%s557] ss:$-1 sm:$0xff]
    %v559 = vrot.slane %v558, 1
    %v560 = vlaneseq
    %v561 = vshrl.u32 %v560, 7
    %vm562 = vcmp.lt.s32.totalorder %v561, 7
    %563 = vst.msk [vmem:[%s550] sm:$0xff] %vm562, %v559
    %s564 = scalar_lea.vmem [#allocation1], 232
    %s565 = scalar_lea.vmem [#allocation0], 464
    %s566 = scalar_lea.vmem %s565, 7 [#allocation0]
    %v567 = vld [vmem:[%s566] ss:$-1 sm:$0xff]
    %v568 = vrot.slane %v567, 1
    %569 = vst [vmem:[%s564] sm:$0xff] %v568
    %s570 = scalar_lea.vmem %s565, 8 [#allocation0]
    %s571 = scalar_lea.vmem %s570, 7 [#allocation0]
    %v572 = vld [vmem:[%s571] ss:$-1 sm:$0xff]
    %v573 = vrot.slane %v572, 1
    %v574 = vlaneseq
    %v575 = vshrl.u32 %v574, 7
    %vm576 = vcmp.lt.s32.totalorder %v575, 7
    %577 = vst.msk [vmem:[%s564] sm:$0xff] %vm576, %v573
    %s578 = scalar_lea.vmem [#allocation1], 240
    %s579 = scalar_lea.vmem [#allocation0], 480
    %s580 = scalar_lea.vmem %s579, 7 [#allocation0]
    %v581 = vld [vmem:[%s580] ss:$-1 sm:$0xff]
    %v582 = vrot.slane %v581, 1
    %583 = vst [vmem:[%s578] sm:$0xff] %v582
    %s584 = scalar_lea.vmem %s579, 8 [#allocation0]
    %s585 = scalar_lea.vmem %s584, 7 [#allocation0]
    %v586 = vld [vmem:[%s585] ss:$-1 sm:$0xff]
    %v587 = vrot.slane %v586, 1
    %v588 = vlaneseq
    %v589 = vshrl.u32 %v588, 7
    %vm590 = vcmp.lt.s32.totalorder %v589, 7
    %591 = vst.msk [vmem:[%s578] sm:$0xff] %vm590, %v587
    %s592 = scalar_lea.vmem [#allocation1], 248
    %s593 = scalar_lea.vmem [#allocation0], 496
    %s594 = scalar_lea.vmem %s593, 7 [#allocation0]
    %v595 = vld [vmem:[%s594] ss:$-1 sm:$0xff]
    %v596 = vrot.slane %v595, 1
    %597 = vst [vmem:[%s592] sm:$0xff] %v596
    %s598 = scalar_lea.vmem %s593, 8 [#allocation0]
    %s599 = scalar_lea.vmem %s598, 7 [#allocation0]
    %v600 = vld [vmem:[%s599] ss:$-1 sm:$0xff]
    %v601 = vrot.slane %v600, 1
    %v602 = vlaneseq
    %v603 = vshrl.u32 %v602, 7
    %vm604 = vcmp.lt.s32.totalorder %v603, 7
    %605 = vst.msk [vmem:[%s592] sm:$0xff] %vm604, %v601
    // Predicated region
    $region36: #{reverse.1} parent=1 // pred_check
      _
    $region37: #{reverse.1} parent=1 // pred_check_branch
      %607 = sbr.rel (0) target = $region39
    $region38: #{reverse.1} parent=1 // pred_region
      // Predicated region
      $region40: #{reverse.1} parent=38 // pred_check
        _
      $region41: #{reverse.1} parent=38 // pred_check_branch
        %609 = sbr.rel (0) target = $region43
      $region42: #{reverse.1} parent=38 // pred_region
        // Predicated region
        $region55: #{reverse.1} parent=42 // pred_check
          _
        $region56: #{reverse.1} parent=42 // pred_check_branch
          %687 = sbr.rel (0) target = $region58
        $region57: #{reverse.1} parent=42 // pred_region
          loop: start=0, step=1, limit=1
          $region59: #{reverse.1} parent=57 // loop_pre_header
            _
          $region60: #{reverse.1} parent=57 // loop_header
            %s689 = sphi 0, %s693
            %p690 = scmp.ge.s32.totalorder %s689, 1
            %s694 = sphi [#allocation1], [#allocation1]
            %s695 = sphi %s1, %s1
          $region61: #{reverse.1} parent=57 // loop_header_branch
            %692 = sbr.rel (%p690) target = $region65
          $region62: #{reverse.1} parent=57 // loop_body
            %v696 = vld [vmem:[%s694] sm:$0xff]
            %697 = vst [vmem:[%s695] sm:$0xff] %v696
            %v698 = vld [vmem:[%s694 + $0x8] sm:$0xff]
            %699 = vst [vmem:[%s695 + $0x8] sm:$0xff] %v698
            %v700 = vld [vmem:[%s694 + $0x10] sm:$0xff]
            %701 = vst [vmem:[%s695 + $0x10] sm:$0xff] %v700
            %v702 = vld [vmem:[%s694 + $0x18] sm:$0xff]
            %703 = vst [vmem:[%s695 + $0x18] sm:$0xff] %v702
            %v704 = vld [vmem:[%s694 + $0x20] sm:$0xff]
            %705 = vst [vmem:[%s695 + $0x20] sm:$0xff] %v704
            %v706 = vld [vmem:[%s694 + $0x28] sm:$0xff]
            %707 = vst [vmem:[%s695 + $0x28] sm:$0xff] %v706
            %v708 = vld [vmem:[%s694 + $0x30] sm:$0xff]
            %709 = vst [vmem:[%s695 + $0x30] sm:$0xff] %v708
            %v710 = vld [vmem:[%s694 + $0x38] sm:$0xff]
            %711 = vst [vmem:[%s695 + $0x38] sm:$0xff] %v710
            %v712 = vld [vmem:[%s694 + $0x40] sm:$0xff]
            %713 = vst [vmem:[%s695 + $0x40] sm:$0xff] %v712
            %v714 = vld [vmem:[%s694 + $0x48] sm:$0xff]
            %715 = vst [vmem:[%s695 + $0x48] sm:$0xff] %v714
            %v716 = vld [vmem:[%s694 + $0x50] sm:$0xff]
            %717 = vst [vmem:[%s695 + $0x50] sm:$0xff] %v716
            %v718 = vld [vmem:[%s694 + $0x58] sm:$0xff]
            %719 = vst [vmem:[%s695 + $0x58] sm:$0xff] %v718
            %v720 = vld [vmem:[%s694 + $0x60] sm:$0xff]
            %721 = vst [vmem:[%s695 + $0x60] sm:$0xff] %v720
            %v722 = vld [vmem:[%s694 + $0x68] sm:$0xff]
            %723 = vst [vmem:[%s695 + $0x68] sm:$0xff] %v722
            %v724 = vld [vmem:[%s694 + $0x70] sm:$0xff]
            %725 = vst [vmem:[%s695 + $0x70] sm:$0xff] %v724
            %v726 = vld [vmem:[%s694 + $0x78] sm:$0xff]
            %727 = vst [vmem:[%s695 + $0x78] sm:$0xff] %v726
            %v728 = vld [vmem:[%s694 + $0x80] sm:$0xff]
            %729 = vst [vmem:[%s695 + $0x80] sm:$0xff] %v728
            %v730 = vld [vmem:[%s694 + $0x88] sm:$0xff]
            %731 = vst [vmem:[%s695 + $0x88] sm:$0xff] %v730
            %v732 = vld [vmem:[%s694 + $0x90] sm:$0xff]
            %733 = vst [vmem:[%s695 + $0x90] sm:$0xff] %v732
            %v734 = vld [vmem:[%s694 + $0x98] sm:$0xff]
            %735 = vst [vmem:[%s695 + $0x98] sm:$0xff] %v734
            %v736 = vld [vmem:[%s694 + $0xa0] sm:$0xff]
            %737 = vst [vmem:[%s695 + $0xa0] sm:$0xff] %v736
            %v738 = vld [vmem:[%s694 + $0xa8] sm:$0xff]
            %739 = vst [vmem:[%s695 + $0xa8] sm:$0xff] %v738
            %v740 = vld [vmem:[%s694 + $0xb0] sm:$0xff]
            %741 = vst [vmem:[%s695 + $0xb0] sm:$0xff] %v740
            %v742 = vld [vmem:[%s694 + $0xb8] sm:$0xff]
            %743 = vst [vmem:[%s695 + $0xb8] sm:$0xff] %v742
            %v744 = vld [vmem:[%s694 + $0xc0] sm:$0xff]
            %745 = vst [vmem:[%s695 + $0xc0] sm:$0xff] %v744
            %v746 = vld [vmem:[%s694 + $0xc8] sm:$0xff]
            %747 = vst [vmem:[%s695 + $0xc8] sm:$0xff] %v746
            %v748 = vld [vmem:[%s694 + $0xd0] sm:$0xff]
            %749 = vst [vmem:[%s695 + $0xd0] sm:$0xff] %v748
            %v750 = vld [vmem:[%s694 + $0xd8] sm:$0xff]
            %751 = vst [vmem:[%s695 + $0xd8] sm:$0xff] %v750
            %v752 = vld [vmem:[%s694 + $0xe0] sm:$0xff]
            %753 = vst [vmem:[%s695 + $0xe0] sm:$0xff] %v752
            %v754 = vld [vmem:[%s694 + $0xe8] sm:$0xff]
            %755 = vst [vmem:[%s695 + $0xe8] sm:$0xff] %v754
            %v756 = vld [vmem:[%s694 + $0xf0] sm:$0xff]
            %757 = vst [vmem:[%s695 + $0xf0] sm:$0xff] %v756
            %v758 = vld [vmem:[%s694 + $0xf8] sm:$0xff]
            %759 = vst [vmem:[%s695 + $0xf8] sm:$0xff] %v758
          $region63: #{reverse.1} parent=57 // loop_footer
            %s693 = sadd.s32 1, %s689
          $region64: #{reverse.1} parent=57 // loop_footer_branch
            %688 = sbr.rel target = $region60
          $region65: #{reverse.1} parent=57 // loop_exit
            _
        $region58: #{reverse.1} parent=42 // pred_fallthru
          _
        // Predicated region
        $region66: #{reverse.1} parent=42 // pred_check
          _
        $region67: #{reverse.1} parent=42 // pred_check_branch
          %761 = sbr.rel target = $region69
        $region68: #{reverse.1} parent=42 // pred_region
          _
        $region69: #{reverse.1} parent=42 // pred_fallthru
          _
      $region43: #{reverse.1} parent=38 // pred_fallthru
        _
      // Predicated region
      $region44: #{reverse.1} parent=38 // pred_check
        _
      $region45: #{reverse.1} parent=38 // pred_check_branch
        %611 = sbr.rel target = $region47
      $region46: #{reverse.1} parent=38 // pred_region
        %s613 = ssub.s32 256, 1
        loop: start=0, step=1, limit=1
        $region48: #{reverse.1} parent=46 // loop_pre_header
          _
        $region49: #{reverse.1} parent=46 // loop_header
          %s615 = sphi 0, %s619
          %p616 = scmp.ge.s32.totalorder %s615, 1
          %s620 = sphi [#allocation1], [#allocation1]
          %s621 = sphi %s1, %s1
        $region50: #{reverse.1} parent=46 // loop_header_branch
          %618 = sbr.rel (%p616) target = $region54
        $region51: #{reverse.1} parent=46 // loop_body
          %v622 = vld [vmem:[%s620] sm:%s613]
          %623 = vst [vmem:[%s621] sm:%s613] %v622
          %v624 = vld [vmem:[%s620 + $0x8] sm:%s613]
          %625 = vst [vmem:[%s621 + $0x8] sm:%s613] %v624
          %v626 = vld [vmem:[%s620 + $0x10] sm:%s613]
          %627 = vst [vmem:[%s621 + $0x10] sm:%s613] %v626
          %v628 = vld [vmem:[%s620 + $0x18] sm:%s613]
          %629 = vst [vmem:[%s621 + $0x18] sm:%s613] %v628
          %v630 = vld [vmem:[%s620 + $0x20] sm:%s613]
          %631 = vst [vmem:[%s621 + $0x20] sm:%s613] %v630
          %v632 = vld [vmem:[%s620 + $0x28] sm:%s613]
          %633 = vst [vmem:[%s621 + $0x28] sm:%s613] %v632
          %v634 = vld [vmem:[%s620 + $0x30] sm:%s613]
          %635 = vst [vmem:[%s621 + $0x30] sm:%s613] %v634
          %v636 = vld [vmem:[%s620 + $0x38] sm:%s613]
          %637 = vst [vmem:[%s621 + $0x38] sm:%s613] %v636
          %v638 = vld [vmem:[%s620 + $0x40] sm:%s613]
          %639 = vst [vmem:[%s621 + $0x40] sm:%s613] %v638
          %v640 = vld [vmem:[%s620 + $0x48] sm:%s613]
          %641 = vst [vmem:[%s621 + $0x48] sm:%s613] %v640
          %v642 = vld [vmem:[%s620 + $0x50] sm:%s613]
          %643 = vst [vmem:[%s621 + $0x50] sm:%s613] %v642
          %v644 = vld [vmem:[%s620 + $0x58] sm:%s613]
          %645 = vst [vmem:[%s621 + $0x58] sm:%s613] %v644
          %v646 = vld [vmem:[%s620 + $0x60] sm:%s613]
          %647 = vst [vmem:[%s621 + $0x60] sm:%s613] %v646
          %v648 = vld [vmem:[%s620 + $0x68] sm:%s613]
          %649 = vst [vmem:[%s621 + $0x68] sm:%s613] %v648
          %v650 = vld [vmem:[%s620 + $0x70] sm:%s613]
          %651 = vst [vmem:[%s621 + $0x70] sm:%s613] %v650
          %v652 = vld [vmem:[%s620 + $0x78] sm:%s613]
          %653 = vst [vmem:[%s621 + $0x78] sm:%s613] %v652
          %v654 = vld [vmem:[%s620 + $0x80] sm:%s613]
          %655 = vst [vmem:[%s621 + $0x80] sm:%s613] %v654
          %v656 = vld [vmem:[%s620 + $0x88] sm:%s613]
          %657 = vst [vmem:[%s621 + $0x88] sm:%s613] %v656
          %v658 = vld [vmem:[%s620 + $0x90] sm:%s613]
          %659 = vst [vmem:[%s621 + $0x90] sm:%s613] %v658
          %v660 = vld [vmem:[%s620 + $0x98] sm:%s613]
          %661 = vst [vmem:[%s621 + $0x98] sm:%s613] %v660
          %v662 = vld [vmem:[%s620 + $0xa0] sm:%s613]
          %663 = vst [vmem:[%s621 + $0xa0] sm:%s613] %v662
          %v664 = vld [vmem:[%s620 + $0xa8] sm:%s613]
          %665 = vst [vmem:[%s621 + $0xa8] sm:%s613] %v664
          %v666 = vld [vmem:[%s620 + $0xb0] sm:%s613]
          %667 = vst [vmem:[%s621 + $0xb0] sm:%s613] %v666
          %v668 = vld [vmem:[%s620 + $0xb8] sm:%s613]
          %669 = vst [vmem:[%s621 + $0xb8] sm:%s613] %v668
          %v670 = vld [vmem:[%s620 + $0xc0] sm:%s613]
          %671 = vst [vmem:[%s621 + $0xc0] sm:%s613] %v670
          %v672 = vld [vmem:[%s620 + $0xc8] sm:%s613]
          %673 = vst [vmem:[%s621 + $0xc8] sm:%s613] %v672
          %v674 = vld [vmem:[%s620 + $0xd0] sm:%s613]
          %675 = vst [vmem:[%s621 + $0xd0] sm:%s613] %v674
          %v676 = vld [vmem:[%s620 + $0xd8] sm:%s613]
          %677 = vst [vmem:[%s621 + $0xd8] sm:%s613] %v676
          %v678 = vld [vmem:[%s620 + $0xe0] sm:%s613]
          %679 = vst [vmem:[%s621 + $0xe0] sm:%s613] %v678
          %v680 = vld [vmem:[%s620 + $0xe8] sm:%s613]
          %681 = vst [vmem:[%s621 + $0xe8] sm:%s613] %v680
          %v682 = vld [vmem:[%s620 + $0xf0] sm:%s613]
          %683 = vst [vmem:[%s621 + $0xf0] sm:%s613] %v682
          %v684 = vld [vmem:[%s620 + $0xf8] sm:%s613]
          %685 = vst [vmem:[%s621 + $0xf8] sm:%s613] %v684
        $region52: #{reverse.1} parent=46 // loop_footer
          %s619 = sadd.s32 1, %s615
        $region53: #{reverse.1} parent=46 // loop_footer_branch
          %614 = sbr.rel target = $region49
        $region54: #{reverse.1} parent=46 // loop_exit
          _
      $region47: #{reverse.1} parent=38 // pred_fallthru
        _
    $region39: #{reverse.1} parent=1 // pred_fallthru
      _
    %762 = vnop

</llo_original>
